<compile_context>
chip_gen: v6e
topology: v6e:2x2x1
jax: 0.10.0
libtpu: 0.0.40
codegen_flags: <defaults>
</compile_context>

<pallas_src>
import functools

import jax
import jax.numpy as jnp
from jax.experimental import pallas as pl
from jax.experimental.pallas import tpu as pltpu

LANE = 128
_X_RESIDENT_BUDGET = 16 * 1024 * 1024  # bytes for a double-buffered resident X/h1


def _round_up(v, m):
    return ((v + m - 1) // m) * m


def _pad2d(x, rows, cols):
    pr, pc = rows - x.shape[0], cols - x.shape[1]
    if pr == 0 and pc == 0:
        return x
    return jnp.pad(x, ((0, pr), (0, pc)))


def _vmem_limit_bytes():
    """Derive a safe scoped-VMEM limit from the actual chip (v7x: 64 MiB/TC)."""
    try:
        cap = pltpu.get_tpu_info().vmem_capacity_bytes
    except Exception:  # noqa: BLE001 - fall back to the most restrictive gen
        cap = 64 * 1024 * 1024
    return int(min(cap * 3 // 4, 96 * 1024 * 1024))


def _choose_tiling(n):
    """Return (n_pad, tm, tk) with tm | n_pad and tk | n_pad."""
    n128 = _round_up(n, LANE)
    if n128 <= 2048:
        # Small-graph fast path: single reduction step (no accumulator RMW /
        # pl.when branching); two row tiles so the parallel axis splits evenly
        # across v7x's two TensorCores.
        n_pad = n128
        tm = n_pad if n_pad <= LANE else n_pad // 2
        return n_pad, tm, n_pad
    # Larger graphs: pad N up to the tile so every A tile is full & unmasked.
    t = 512 if n128 <= 8192 else 1024
    n_pad = _round_up(n, t)
    return n_pad, t, t


# ----------------------------- Pallas kernels ------------------------------


def _gcn_relu_kernel(a_ref, x_ref, w_ref, b_ref, o_ref, acc_ref, *,
                     tk, single_k, x_resident):
    """out[i] = relu( (sum_k A[i,k] @ X[k]) @ W1 + b1 )  -- layer-1 GCNConv + relu."""
    k = pl.program_id(1)
    if single_k or not x_resident:
        x_blk = x_ref[...]
    else:
        x_blk = x_ref[pl.ds(pl.multiple_of(k * tk, LANE), tk), :]
    part = jnp.dot(a_ref[...], x_blk, preferred_element_type=jnp.float32)

    def finalize(acc):
        ax = acc.astype(jnp.bfloat16)  # bf16 MXU operand, f32 accumulate
        h = jnp.dot(ax, w_ref[...], preferred_element_type=jnp.float32) + b_ref[...]
        o_ref[...] = jnp.maximum(h, 0.0).astype(o_ref.dtype)

    if single_k:
        finalize(part)
    else:
        @pl.when(k == 0)
        def _():
            acc_ref[...] = jnp.zeros_like(acc_ref)

        acc_ref[...] += part

        @pl.when(k == pl.num_programs(1) - 1)
        def _():
            finalize(acc_ref[...])


def _gcn_linear_kernel(a_ref, h_ref, g_ref, w2_ref, b2_ref, wl_loc_ref,
                       wl_glob_ref, bl_ref, o_ref, acc_ref, *,
                       tk, single_k, x_resident):
    """Layer-2 GCNConv fused with the final Linear over concat([h2, glob])."""
    k = pl.program_id(1)
    if single_k or not x_resident:
        h_blk = h_ref[...]
    else:
        h_blk = h_ref[pl.ds(pl.multiple_of(k * tk, LANE), tk), :]
    part = jnp.dot(a_ref[...], h_blk, preferred_element_type=jnp.float32)

    def finalize(acc):
        ax = acc.astype(jnp.bfloat16)
        h2 = jnp.dot(ax, w2_ref[...], preferred_element_type=jnp.float32) + b2_ref[...]
        # concat([h2, glob]) @ Wlin  ==  h2 @ Wlin_loc + glob @ Wlin_glob
        # (two dots -> no (tm, loc+glob) concat temporary in the epilogue)
        res = (jnp.dot(h2.astype(jnp.bfloat16), wl_loc_ref[...],
                       preferred_element_type=jnp.float32)
               + jnp.dot(g_ref[...], wl_glob_ref[...],
                         preferred_element_type=jnp.float32)
               + bl_ref[...])
        o_ref[...] = res.astype(o_ref.dtype)

    if single_k:
        finalize(part)
    else:
        @pl.when(k == 0)
        def _():
            acc_ref[...] = jnp.zeros_like(acc_ref)

        acc_ref[...] += part

        @pl.when(k == pl.num_programs(1) - 1)
        def _():
            finalize(acc_ref[...])


# ----------------------------- pallas_call wrappers -------------------------


def _fused_gcn_relu(a_hat, x, w, b, *, tm, tk):
    n_pad = a_hat.shape[0]
    f_in = x.shape[1]
    f_out = w.shape[1]
    grid = (n_pad // tm, n_pad // tk)
    single_k = grid[1] == 1
    x_resident = single_k or (2 * n_pad * f_in * 2) <= _X_RESIDENT_BUDGET
    x_spec = (pl.BlockSpec((n_pad, f_in), lambda i, k: (0, 0)) if x_resident
              else pl.BlockSpec((tk, f_in), lambda i, k: (k, 0)))
    kernel = functools.partial(_gcn_relu_kernel, tk=tk, single_k=single_k,
                               x_resident=x_resident)
    return pl.pallas_call(
        kernel,
        out_shape=jax.ShapeDtypeStruct((n_pad, f_out), jnp.bfloat16),
        grid_spec=pltpu.PrefetchScalarGridSpec(
            num_scalar_prefetch=0,
            grid=grid,
            in_specs=[
                pl.BlockSpec((tm, tk), lambda i, k: (i, k)),       # A_hat tile (streamed)
                x_spec,                                            # X (resident / k-streamed)
                pl.BlockSpec((f_in, f_out), lambda i, k: (0, 0)),  # W1 resident
                pl.BlockSpec((1, f_out), lambda i, k: (0, 0)),     # b1 resident
            ],
            out_specs=pl.BlockSpec((tm, f_out), lambda i, k: (i, 0)),
            scratch_shapes=[pltpu.VMEM((tm, f_in), jnp.float32)],
        ),
        compiler_params=pltpu.CompilerParams(
            dimension_semantics=("parallel", "arbitrary"),
            vmem_limit_bytes=_vmem_limit_bytes(),
        ),
    )(a_hat, x, w, b)


def _fused_gcn_linear(a_hat, h, glob, w2, b2, wl_loc, wl_glob, b_lin, *, tm, tk):
    n_pad = a_hat.shape[0]
    hid = h.shape[1]
    gf = glob.shape[1]
    loc = w2.shape[1]
    out_f = wl_loc.shape[1]
    grid = (n_pad // tm, n_pad // tk)
    single_k = grid[1] == 1
    h_resident = single_k or (2 * n_pad * hid * 2) <= _X_RESIDENT_BUDGET
    h_spec = (pl.BlockSpec((n_pad, hid), lambda i, k: (0, 0)) if h_resident
              else pl.BlockSpec((tk, hid), lambda i, k: (k, 0)))
    kernel = functools.partial(_gcn_linear_kernel, tk=tk, single_k=single_k,
                               x_resident=h_resident)
    return pl.pallas_call(
        kernel,
        out_shape=jax.ShapeDtypeStruct((n_pad, out_f), jnp.float32),
        grid_spec=pltpu.PrefetchScalarGridSpec(
            num_scalar_prefetch=0,
            grid=grid,
            in_specs=[
                pl.BlockSpec((tm, tk), lambda i, k: (i, k)),        # A_hat tile (streamed)
                h_spec,                                             # h1 (resident / k-streamed)
                pl.BlockSpec((tm, gf), lambda i, k: (i, 0)),        # glob row tile
                pl.BlockSpec((hid, loc), lambda i, k: (0, 0)),      # W2 resident
                pl.BlockSpec((1, loc), lambda i, k: (0, 0)),        # b2 resident
                pl.BlockSpec((loc, out_f), lambda i, k: (0, 0)),    # Wlin (loc half)
                pl.BlockSpec((gf, out_f), lambda i, k: (0, 0)),     # Wlin (glob half)
                pl.BlockSpec((1, out_f), lambda i, k: (0, 0)),      # blin resident
            ],
            out_specs=pl.BlockSpec((tm, out_f), lambda i, k: (i, 0)),
            scratch_shapes=[pltpu.VMEM((tm, hid), jnp.float32)],
        ),
        compiler_params=pltpu.CompilerParams(
            dimension_semantics=("parallel", "arbitrary"),
            vmem_limit_bytes=_vmem_limit_bytes(),
        ),
    )(a_hat, h, glob, w2, b2, wl_loc, wl_glob, b_lin)


# ------------------------------- glue (JAX) ---------------------------------


def build_gcn_adj(edge_index, num_nodes, n_pad, dtype=jnp.bfloat16):
    """Dense symmetric-normalized adjacency matching PyG GCNConv gcn_norm.

    Built directly at padded size and in 'row = target, col = source'
    orientation: M[t,s] = d_t^{-1/2} d_s^{-1/2} for every edge s->t, so no
    transpose is needed and padding rows/cols are exactly zero.
    # TODO(synk): PyG add_remaining_self_loops skips nodes that already have a
    # self-loop; here self-loops are added unconditionally (as in the baseline).
    """
    src, dst = edge_index[0], edge_index[1]
    a = jnp.zeros((n_pad, n_pad), jnp.float32).at[dst, src].add(1.0)
    diag = jnp.arange(num_nodes)
    a = a.at[diag, diag].add(1.0)  # self-loops for real nodes only
    deg = a.sum(axis=1)
    dinv = jnp.where(deg > 0.0, jax.lax.rsqrt(jnp.maximum(deg, 1e-12)), 0.0)
    return (dinv[:, None] * a * dinv[None, :]).astype(dtype)


def init_params(key, in_channels, hidden, loc_out, glob_out, out_channels):
    ks = jax.random.split(key, 6)

    def glorot(k, shape):
        limit = jnp.sqrt(6.0 / (shape[0] + shape[1]))
        return jax.random.uniform(k, shape, jnp.float32, -limit, limit)

    return {
        "w1": glorot(ks[0], (in_channels, hidden)),
        "b1": jnp.zeros((hidden,), jnp.float32),
        "w2": glorot(ks[1], (hidden, loc_out)),
        "b2": jnp.zeros((loc_out,), jnp.float32),
        # nn.Linear(loc_out + glob_out, out): stored transposed & split per half.
        "w_lin_loc": glorot(ks[2], (loc_out, out_channels)),
        "w_lin_glob": glorot(ks[3], (glob_out, out_channels)),
        "b_lin": glorot(ks[4], (1, out_channels)).reshape(-1),
    }


def fedgsl_gcn_forward(params, batch_x, edge_index, glob_emb):
    n, f_in = batch_x.shape
    hidden = params["w1"].shape[1]
    loc = params["w2"].shape[1]
    gf = glob_emb.shape[1]
    outc = params["b_lin"].shape[0]

    n_pad, tm, tk = _choose_tiling(n)
    f_in_p = _round_up(f_in, LANE)
    hid_p = _round_up(hidden, LANE)
    loc_p = _round_up(loc, LANE)
    glob_p = _round_up(gf, LANE)
    out_p = _round_up(outc, LANE)

    # A_hat is built at padded size, already oriented, cast once to bf16.
    a_p = build_gcn_adj(edge_index, n, n_pad, dtype=jnp.bfloat16)
    x_p = _pad2d(batch_x.astype(jnp.bfloat16), n_pad, f_in_p)
    g_p = _pad2d(glob_emb.astype(jnp.bfloat16), n_pad, glob_p)

    w1 = _pad2d(params["w1"].astype(jnp.bfloat16), f_in_p, hid_p)
    b1 = _pad2d(params["b1"].reshape(1, -1), 1, hid_p)
    w2 = _pad2d(params["w2"].astype(jnp.bfloat16), hid_p, loc_p)
    b2 = _pad2d(params["b2"].reshape(1, -1), 1, loc_p)
    wl_loc = _pad2d(params["w_lin_loc"].astype(jnp.bfloat16), loc_p, out_p)
    wl_glob = _pad2d(params["w_lin_glob"].astype(jnp.bfloat16), glob_p, out_p)
    b_lin = _pad2d(params["b_lin"].reshape(1, -1), 1, out_p)

    # conv0 + relu   (dropout p=0.0 / eval -> identity, omitted)
    h1 = _fused_gcn_relu(a_p, x_p, w1, b1, tm=tm, tk=tk)
    # conv1 fused with lin1(concat([h2, glob_emb], dim=1))
    res = _fused_gcn_linear(a_p, h1, g_p, w2, b2, wl_loc, wl_glob, b_lin,
                            tm=tm, tk=tk)
    return res[:n, :outc]


# Pure-JAX reference mirroring the kernel's bf16-operand / f32-accumulate path.
def fedgsl_gcn_reference(params, batch_x, edge_index, glob_emb):
    def rnd(x):
        return x.astype(jnp.bfloat16).astype(jnp.float32)

    n = batch_x.shape[0]
    a = rnd(build_gcn_adj(edge_index, n, n, dtype=jnp.float32))
    x = rnd(batch_x)
    g = rnd(glob_emb)
    w1, b1 = rnd(params["w1"]), params["b1"]
    w2, b2 = rnd(params["w2"]), params["b2"]
    wl_loc, wl_glob = rnd(params["w_lin_loc"]), rnd(params["w_lin_glob"])
    bl = params["b_lin"]

    h1 = rnd(jnp.maximum(rnd(a @ x) @ w1 + b1, 0.0))
    h2 = rnd(a @ h1) @ w2 + b2
    return rnd(h2) @ wl_loc + g @ wl_glob + bl


# --------------------------------- main --------------------------------------

if __name__ == "__main__":
    N_NODES = 300          # pads to 384 -> grid (2 row tiles, 1 reduction step)
    IN_CHANNELS = 16
    HIDDEN = 64
    LOC_OUT = 64
    GLOB_OUT = 64
    OUT_CHANNELS = 8
    N_EDGES = 1200

    key = jax.random.PRNGKey(0)
    k_x, k_g, k_s, k_d, k_p = jax.random.split(key, 5)

    batch_x = jax.random.normal(k_x, (N_NODES, IN_CHANNELS), jnp.float32)
    glob_emb = jax.random.normal(k_g, (N_NODES, GLOB_OUT), jnp.float32)

    src = jax.random.randint(k_s, (N_EDGES,), 0, N_NODES)
    dst = jax.random.randint(k_d, (N_EDGES,), 0, N_NODES)
    edge_index = jnp.stack(
        [jnp.concatenate([src, dst]), jnp.concatenate([dst, src])], axis=0
    )

    params = init_params(k_p, IN_CHANNELS, HIDDEN, LOC_OUT, GLOB_OUT, OUT_CHANNELS)

    fwd = jax.jit(fedgsl_gcn_forward)
    res = fwd(params, batch_x, edge_index, glob_emb)
    jax.block_until_ready(res)
    assert res.shape == (N_NODES, OUT_CHANNELS)

    ref = fedgsl_gcn_reference(params, batch_x, edge_index, glob_emb)
    max_err = float(jnp.max(jnp.abs(res - ref)))
    assert max_err < 1e-1, f"max abs err {max_err}"

    print("KERNEL_OK")
</pallas_src>

<mosaic_0001>
module attributes {stable_mosaic.version = 11 : i64} {
  func.func private @main(%arg0: i32) attributes {dimension_semantics = [#tpu.dimension_semantics<core_parallel>], iteration_bounds = array<i64: 2>, tpu.core_type = #tpu.core_type<sc_scalar_subcore>, window_params = []} {
    return
  }
}

module attributes {stable_mosaic.version = 11 : i64} {
  func.func private @main(%arg0: i32) attributes {dimension_semantics = [#tpu.dimension_semantics<core_parallel>], iteration_bounds = array<i64: 2>, tpu.core_type = #tpu.core_type<sc_scalar_subcore>, window_params = []} {
    return
  }
}

module attributes {stable_mosaic.version = 11 : i64} {
  func.func @_gcn_relu_kernel(%arg0: i32, %arg1: i32, %arg2: memref<192x384xbf16, #tpu.memory_space<vmem>>, %arg3: memref<384x128xbf16, #tpu.memory_space<vmem>>, %arg4: memref<128x128xbf16, #tpu.memory_space<vmem>>, %arg5: memref<1x128xf32, #tpu.memory_space<vmem>>, %arg6: memref<192x128xbf16, #tpu.memory_space<vmem>>, %arg7: memref<192x128xf32, #tpu.memory_space<vmem>>) attributes {dimension_semantics = [#tpu.dimension_semantics<parallel>, #tpu.dimension_semantics<arbitrary>], iteration_bounds = array<i64: 2, 1>, scalar_prefetch = 0 : i64, scratch_operands = 1 : i64, tpu.core_type = #tpu.core_type<tc>, window_params = [{transform_indices = @transform_0, window_bounds = array<i64: 192, 384>}, {pipeline_mode = #tpu.pipeline_mode<synchronous>, transform_indices = @transform_1, window_bounds = array<i64: 384, 128>}, {pipeline_mode = #tpu.pipeline_mode<synchronous>, transform_indices = @transform_2, window_bounds = array<i64: 128, 128>}, {pipeline_mode = #tpu.pipeline_mode<synchronous>, transform_indices = @transform_3, window_bounds = array<i64: 1, 128>}, {transform_indices = @transform_4, window_bounds = array<i64: 192, 128>}]} {
    %c0 = arith.constant 0 : index
    %c0_0 = arith.constant 0 : index
    %0 = vector.load %arg3[%c0, %c0_0] : memref<384x128xbf16, #tpu.memory_space<vmem>>, vector<384x128xbf16>
    %c0_1 = arith.constant 0 : index
    %c0_2 = arith.constant 0 : index
    %1 = vector.load %arg2[%c0_1, %c0_2] : memref<192x384xbf16, #tpu.memory_space<vmem>>, vector<192x384xbf16>
    %cst = arith.constant dense<0.000000e+00> : vector<192x128xf32>
    %2 = tpu.matmul %1, %0, %cst {dimension_numbers = #tpu.dot_dimension_numbers<[1], [0], [0], [1], [0, 0, 1, 1], [], []>} : vector<192x384xbf16>, vector<384x128xbf16>, vector<192x128xf32> -> vector<192x128xf32>
    %3 = arith.truncf %2 : vector<192x128xf32> to vector<192x128xbf16>
    %c0_3 = arith.constant 0 : index
    %c0_4 = arith.constant 0 : index
    %4 = vector.load %arg4[%c0_3, %c0_4] : memref<128x128xbf16, #tpu.memory_space<vmem>>, vector<128x128xbf16>
    %cst_5 = arith.constant dense<0.000000e+00> : vector<192x128xf32>
    %5 = tpu.matmul %3, %4, %cst_5 {dimension_numbers = #tpu.dot_dimension_numbers<[1], [0], [0], [1], [0, 0, 1, 1], [], []>} : vector<192x128xbf16>, vector<128x128xbf16>, vector<192x128xf32> -> vector<192x128xf32>
    %c0_6 = arith.constant 0 : index
    %c0_7 = arith.constant 0 : index
    %6 = vector.load %arg5[%c0_6, %c0_7] : memref<1x128xf32, #tpu.memory_space<vmem>>, vector<1x128xf32>
    %7 = vector.broadcast %6 : vector<1x128xf32> to vector<192x128xf32>
    %8 = arith.addf %5, %7 : vector<192x128xf32>
    %cst_8 = arith.constant 0.000000e+00 : f32
    %9 = vector.broadcast %cst_8 : f32 to vector<192x128xf32>
    %10 = arith.maximumf %8, %9 : vector<192x128xf32>
    %11 = arith.truncf %10 : vector<192x128xf32> to vector<192x128xbf16>
    %c0_9 = arith.constant 0 : index
    %c0_10 = arith.constant 0 : index
    %12 = vector.load %arg6[%c0_9, %c0_10] : memref<192x128xbf16, #tpu.memory_space<vmem>>, vector<192x128xbf16>
    tpu.vector_store %arg6[%c0_9, %c0_10], %11 {strides = array<i32>} : memref<192x128xbf16, #tpu.memory_space<vmem>>, vector<192x128xbf16>,
    return
  }
  func.func @transform_0(%arg0: i32, %arg1: i32) -> (i32, i32) {
    %c0_i32 = arith.constant 0 : i32
    return %arg0, %arg1 : i32, i32
  }
  func.func @transform_1(%arg0: i32, %arg1: i32) -> (i32, i32) {
    %c0_i32 = arith.constant 0 : i32
    %c0_i32_0 = arith.constant 0 : i32
    %c0_i32_1 = arith.constant 0 : i32
    return %c0_i32, %c0_i32_0 : i32, i32
  }
  func.func @transform_2(%arg0: i32, %arg1: i32) -> (i32, i32) {
    %c0_i32 = arith.constant 0 : i32
    %c0_i32_0 = arith.constant 0 : i32
    %c0_i32_1 = arith.constant 0 : i32
    return %c0_i32, %c0_i32_0 : i32, i32
  }
  func.func @transform_3(%arg0: i32, %arg1: i32) -> (i32, i32) {
    %c0_i32 = arith.constant 0 : i32
    %c0_i32_0 = arith.constant 0 : i32
    %c0_i32_1 = arith.constant 0 : i32
    return %c0_i32, %c0_i32_0 : i32, i32
  }
  func.func @transform_4(%arg0: i32, %arg1: i32) -> (i32, i32) {
    %c0_i32 = arith.constant 0 : i32
    %c0_i32_0 = arith.constant 0 : i32
    return %arg0, %c0_i32 : i32, i32
  }
}

module attributes {stable_mosaic.version = 11 : i64} {
  func.func @_gcn_linear_kernel(%arg0: i32, %arg1: i32, %arg2: memref<192x384xbf16, #tpu.memory_space<vmem>>, %arg3: memref<384x128xbf16, #tpu.memory_space<vmem>>, %arg4: memref<192x128xbf16, #tpu.memory_space<vmem>>, %arg5: memref<128x128xbf16, #tpu.memory_space<vmem>>, %arg6: memref<1x128xf32, #tpu.memory_space<vmem>>, %arg7: memref<128x128xbf16, #tpu.memory_space<vmem>>, %arg8: memref<128x128xbf16, #tpu.memory_space<vmem>>, %arg9: memref<1x128xf32, #tpu.memory_space<vmem>>, %arg10: memref<192x128xf32, #tpu.memory_space<vmem>>, %arg11: memref<192x128xf32, #tpu.memory_space<vmem>>) attributes {dimension_semantics = [#tpu.dimension_semantics<parallel>, #tpu.dimension_semantics<arbitrary>], iteration_bounds = array<i64: 2, 1>, scalar_prefetch = 0 : i64, scratch_operands = 1 : i64, tpu.core_type = #tpu.core_type<tc>, window_params = [{transform_indices = @transform_0, window_bounds = array<i64: 192, 384>}, {pipeline_mode = #tpu.pipeline_mode<synchronous>, transform_indices = @transform_1, window_bounds = array<i64: 384, 128>}, {transform_indices = @transform_2, window_bounds = array<i64: 192, 128>}, {pipeline_mode = #tpu.pipeline_mode<synchronous>, transform_indices = @transform_3, window_bounds = array<i64: 128, 128>}, {pipeline_mode = #tpu.pipeline_mode<synchronous>, transform_indices = @transform_4, window_bounds = array<i64: 1, 128>}, {pipeline_mode = #tpu.pipeline_mode<synchronous>, transform_indices = @transform_5, window_bounds = array<i64: 128, 128>}, {pipeline_mode = #tpu.pipeline_mode<synchronous>, transform_indices = @transform_6, window_bounds = array<i64: 128, 128>}, {pipeline_mode = #tpu.pipeline_mode<synchronous>, transform_indices = @transform_7, window_bounds = array<i64: 1, 128>}, {transform_indices = @transform_8, window_bounds = array<i64: 192, 128>}]} {
    %c0 = arith.constant 0 : index
    %c0_0 = arith.constant 0 : index
    %0 = vector.load %arg3[%c0, %c0_0] : memref<384x128xbf16, #tpu.memory_space<vmem>>, vector<384x128xbf16>
    %c0_1 = arith.constant 0 : index
    %c0_2 = arith.constant 0 : index
    %1 = vector.load %arg2[%c0_1, %c0_2] : memref<192x384xbf16, #tpu.memory_space<vmem>>, vector<192x384xbf16>
    %cst = arith.constant dense<0.000000e+00> : vector<192x128xf32>
    %2 = tpu.matmul %1, %0, %cst {dimension_numbers = #tpu.dot_dimension_numbers<[1], [0], [0], [1], [0, 0, 1, 1], [], []>} : vector<192x384xbf16>, vector<384x128xbf16>, vector<192x128xf32> -> vector<192x128xf32>
    %3 = arith.truncf %2 : vector<192x128xf32> to vector<192x128xbf16>
    %c0_3 = arith.constant 0 : index
    %c0_4 = arith.constant 0 : index
    %4 = vector.load %arg5[%c0_3, %c0_4] : memref<128x128xbf16, #tpu.memory_space<vmem>>, vector<128x128xbf16>
    %cst_5 = arith.constant dense<0.000000e+00> : vector<192x128xf32>
    %5 = tpu.matmul %3, %4, %cst_5 {dimension_numbers = #tpu.dot_dimension_numbers<[1], [0], [0], [1], [0, 0, 1, 1], [], []>} : vector<192x128xbf16>, vector<128x128xbf16>, vector<192x128xf32> -> vector<192x128xf32>
    %c0_6 = arith.constant 0 : index
    %c0_7 = arith.constant 0 : index
    %6 = vector.load %arg6[%c0_6, %c0_7] : memref<1x128xf32, #tpu.memory_space<vmem>>, vector<1x128xf32>
    %7 = vector.broadcast %6 : vector<1x128xf32> to vector<192x128xf32>
    %8 = arith.addf %5, %7 : vector<192x128xf32>
    %9 = arith.truncf %8 : vector<192x128xf32> to vector<192x128xbf16>
    %c0_8 = arith.constant 0 : index
    %c0_9 = arith.constant 0 : index
    %10 = vector.load %arg7[%c0_8, %c0_9] : memref<128x128xbf16, #tpu.memory_space<vmem>>, vector<128x128xbf16>
    %cst_10 = arith.constant dense<0.000000e+00> : vector<192x128xf32>
    %11 = tpu.matmul %9, %10, %cst_10 {dimension_numbers = #tpu.dot_dimension_numbers<[1], [0], [0], [1], [0, 0, 1, 1], [], []>} : vector<192x128xbf16>, vector<128x128xbf16>, vector<192x128xf32> -> vector<192x128xf32>
    %c0_11 = arith.constant 0 : index
    %c0_12 = arith.constant 0 : index
    %12 = vector.load %arg4[%c0_11, %c0_12] : memref<192x128xbf16, #tpu.memory_space<vmem>>, vector<192x128xbf16>
    %c0_13 = arith.constant 0 : index
    %c0_14 = arith.constant 0 : index
    %13 = vector.load %arg8[%c0_13, %c0_14] : memref<128x128xbf16, #tpu.memory_space<vmem>>, vector<128x128xbf16>
    %cst_15 = arith.constant dense<0.000000e+00> : vector<192x128xf32>
    %14 = tpu.matmul %12, %13, %cst_15 {dimension_numbers = #tpu.dot_dimension_numbers<[1], [0], [0], [1], [0, 0, 1, 1], [], []>} : vector<192x128xbf16>, vector<128x128xbf16>, vector<192x128xf32> -> vector<192x128xf32>
    %15 = arith.addf %11, %14 : vector<192x128xf32>
    %c0_16 = arith.constant 0 : index
    %c0_17 = arith.constant 0 : index
    %16 = vector.load %arg9[%c0_16, %c0_17] : memref<1x128xf32, #tpu.memory_space<vmem>>, vector<1x128xf32>
    %17 = vector.broadcast %16 : vector<1x128xf32> to vector<192x128xf32>
    %18 = arith.addf %15, %17 : vector<192x128xf32>
    %c0_18 = arith.constant 0 : index
    %c0_19 = arith.constant 0 : index
    %19 = vector.load %arg10[%c0_18, %c0_19] : memref<192x128xf32, #tpu.memory_space<vmem>>, vector<192x128xf32>
    tpu.vector_store %arg10[%c0_18, %c0_19], %18 {strides = array<i32>} : memref<192x128xf32, #tpu.memory_space<vmem>>, vector<192x128xf32>,
    return
  }
  func.func @transform_0(%arg0: i32, %arg1: i32) -> (i32, i32) {
    %c0_i32 = arith.constant 0 : i32
    return %arg0, %arg1 : i32, i32
  }
  func.func @transform_1(%arg0: i32, %arg1: i32) -> (i32, i32) {
    %c0_i32 = arith.constant 0 : i32
    %c0_i32_0 = arith.constant 0 : i32
    %c0_i32_1 = arith.constant 0 : i32
    return %c0_i32, %c0_i32_0 : i32, i32
  }
  func.func @transform_2(%arg0: i32, %arg1: i32) -> (i32, i32) {
    %c0_i32 = arith.constant 0 : i32
    %c0_i32_0 = arith.constant 0 : i32
    return %arg0, %c0_i32 : i32, i32
  }
  func.func @transform_3(%arg0: i32, %arg1: i32) -> (i32, i32) {
    %c0_i32 = arith.constant 0 : i32
    %c0_i32_0 = arith.constant 0 : i32
    %c0_i32_1 = arith.constant 0 : i32
    return %c0_i32, %c0_i32_0 : i32, i32
  }
  func.func @transform_4(%arg0: i32, %arg1: i32) -> (i32, i32) {
    %c0_i32 = arith.constant 0 : i32
    %c0_i32_0 = arith.constant 0 : i32
    %c0_i32_1 = arith.constant 0 : i32
    return %c0_i32, %c0_i32_0 : i32, i32
  }
  func.func @transform_5(%arg0: i32, %arg1: i32) -> (i32, i32) {
    %c0_i32 = arith.constant 0 : i32
    %c0_i32_0 = arith.constant 0 : i32
    %c0_i32_1 = arith.constant 0 : i32
    return %c0_i32, %c0_i32_0 : i32, i32
  }
  func.func @transform_6(%arg0: i32, %arg1: i32) -> (i32, i32) {
    %c0_i32 = arith.constant 0 : i32
    %c0_i32_0 = arith.constant 0 : i32
    %c0_i32_1 = arith.constant 0 : i32
    return %c0_i32, %c0_i32_0 : i32, i32
  }
  func.func @transform_7(%arg0: i32, %arg1: i32) -> (i32, i32) {
    %c0_i32 = arith.constant 0 : i32
    %c0_i32_0 = arith.constant 0 : i32
    %c0_i32_1 = arith.constant 0 : i32
    return %c0_i32, %c0_i32_0 : i32, i32
  }
  func.func @transform_8(%arg0: i32, %arg1: i32) -> (i32, i32) {
    %c0_i32 = arith.constant 0 : i32
    %c0_i32_0 = arith.constant 0 : i32
    return %arg0, %c0_i32 : i32, i32
  }
}

</mosaic_0001>

<llo_original>
// kernel: fedgsl_gcn_forward.2
$region0: #{fedgsl_gcn_forward.2}
  #allocation0 [shape = 'u32[]', space=smem, size = 0x4, offset = 0x4, fixed_abs, tag = 'smem constant byte address 0x4 - core index']
  #allocation1 [shape = 'u32[144,128]{1,0:T(1,128)}', space=vmem, size = 0x12000, scoped, tag = 'internal scratch']
  #allocation2 [shape = 'f32[192,128]{1,0:T(8,128)}', space=vmem, size = 0x18000, scoped, tag = 'scratch operand']
  %s0 = inlined_call_operand.vmem [shape: bf16[384,384], index: 0, kind: input, shape index: {}]
  %s1 = inlined_call_operand.vmem [shape: bf16[384,128], index: 1, kind: input, shape index: {}]
  %s2 = inlined_call_operand.vmem [shape: bf16[128,128], index: 2, kind: input, shape index: {}]
  %s3 = inlined_call_operand.vmem [shape: f32[1,128], index: 3, kind: input, shape index: {}]
  %s4 = inlined_call_operand.vmem [shape: bf16[384,128], index: 4, kind: output, shape index: {}]
  %s5 = sld [smem:[#allocation0]]
  $region49: #{fedgsl_gcn_forward.2} parent=0
    _
  %s7 = ssub.s32 1, %s5
  %s8 = scalar_select 0, %s7, %s5
  loop: start=0, step=1, limit=4
  $region2: #{fedgsl_gcn_forward.2} parent=0 // loop_pre_header
    _
  $region3: #{fedgsl_gcn_forward.2} parent=0 // loop_header
    %s10 = sphi 0, %s14
    %p11 = scmp.ge.s32.totalorder %s10, 4
    %s17 = sphi 0, %s29
    %s18 = sphi 0, %s25
    %s19 = sphi 0, %s17
    %s20 = sphi 0, %s18
    %s21 = sphi 0, %s19
    %s22 = sphi 0, %s20
    %s34 = sphi 0, %s36
    %s37 = sphi 0, %s34
    %s38 = sphi 0, %s37
    %s54 = sphi 0, %s38
    %s58 = sphi 0, %s58
    %s60 = sphi 0, %s58
    %s61 = sphi 0, %s60
    %s75 = sphi 0, %s61
    %s79 = sphi 0, %s79
    %s81 = sphi 0, %s79
    %s82 = sphi 0, %s81
    %s96 = sphi 0, %s82
    %s100 = sphi 0, %s100
    %s102 = sphi 0, %s100
    %s103 = sphi 0, %s102
    %s117 = sphi 0, %s103
    %s123 = sphi 0, %s125
    %s126 = sphi 0, %s123
    %s127 = sphi 0, %s126
    %s143 = sphi 0, %s127
  $region4: #{fedgsl_gcn_forward.2} parent=0 // loop_header_branch
    %13 = sbr.rel (%p11) target = $region8
  $region5: #{fedgsl_gcn_forward.2} parent=0 // loop_body
    %s15 = ssub.s32 %s10, 1
    %s16 = ssub.s32 %s10, 2
    %s23 = sadd.s32 1, %s18
    %p24 = scmp.ge.s32.totalorder %s23, 1
    %s25 = scalar_select %p24, 0, %s23
    %s26 = sadd.s32 1, %s17
    %s27 = scalar_select %p24, %s26, %s17
    %p28 = scmp.ge.s32.totalorder %s27, 2
    %s29 = scalar_select %p28, 0, %s27
    %s30 = ssub.s32 %s17, %s29
    %s31 = ssub.s32 %s18, %s25
    %s32 = sor.u32 %s30, %s31
    %p33 = scmp.eq.s32.totalorder %s32, 0
    %s35 = sadd.s32 %s34, 1
    %s36 = scalar_select %p33, %s34, %s35
    %p39 = pneg %p33
    %p40 = scmp.eq.s32.totalorder %s10, 1
    %p41 = por %p39, %p40
    %p42 = scmp.ne.s32.totalorder %s34, %s37
    %p43 = scmp.eq.s32.totalorder %s10, 0
    %p44 = por %p42, %p43
    %p45 = scmp.ne.s32.totalorder %s34, %s37
    %p46 = scmp.eq.s32.totalorder %s15, 1
    %p47 = por %p45, %p46
    %p48 = scmp.ne.s32.totalorder %s37, %s38
    %p49 = scmp.eq.s32.totalorder %s15, 0
    %p50 = por %p48, %p49
    %p51 = scmp.ne.s32.totalorder %s37, %s38
    %p52 = scmp.eq.s32.totalorder %s16, 1
    %p53 = por %p51, %p52
    %p55 = scmp.ne.s32.totalorder %s38, %s54
    %p56 = scmp.eq.s32.totalorder %s16, 0
    %p57 = por %p55, %p56
    %s59 = sadd.s32 %s58, 1
    %p62 = scmp.eq.s32.totalorder %s10, 1
    %p63 = scmp.ne.s32.totalorder %s58, %s60
    %p64 = scmp.eq.s32.totalorder %s10, 0
    %p65 = por %p63, %p64
    %p66 = scmp.ne.s32.totalorder %s58, %s60
    %p67 = scmp.eq.s32.totalorder %s15, 1
    %p68 = por %p66, %p67
    %p69 = scmp.ne.s32.totalorder %s60, %s61
    %p70 = scmp.eq.s32.totalorder %s15, 0
    %p71 = por %p69, %p70
    %p72 = scmp.ne.s32.totalorder %s60, %s61
    %p73 = scmp.eq.s32.totalorder %s16, 1
    %p74 = por %p72, %p73
    %p76 = scmp.ne.s32.totalorder %s61, %s75
    %p77 = scmp.eq.s32.totalorder %s16, 0
    %p78 = por %p76, %p77
    %s80 = sadd.s32 %s79, 1
    %p83 = scmp.eq.s32.totalorder %s10, 1
    %p84 = scmp.ne.s32.totalorder %s79, %s81
    %p85 = scmp.eq.s32.totalorder %s10, 0
    %p86 = por %p84, %p85
    %p87 = scmp.ne.s32.totalorder %s79, %s81
    %p88 = scmp.eq.s32.totalorder %s15, 1
    %p89 = por %p87, %p88
    %p90 = scmp.ne.s32.totalorder %s81, %s82
    %p91 = scmp.eq.s32.totalorder %s15, 0
    %p92 = por %p90, %p91
    %p93 = scmp.ne.s32.totalorder %s81, %s82
    %p94 = scmp.eq.s32.totalorder %s16, 1
    %p95 = por %p93, %p94
    %p97 = scmp.ne.s32.totalorder %s82, %s96
    %p98 = scmp.eq.s32.totalorder %s16, 0
    %p99 = por %p97, %p98
    %s101 = sadd.s32 %s100, 1
    %p104 = scmp.eq.s32.totalorder %s10, 1
    %p105 = scmp.ne.s32.totalorder %s100, %s102
    %p106 = scmp.eq.s32.totalorder %s10, 0
    %p107 = por %p105, %p106
    %p108 = scmp.ne.s32.totalorder %s100, %s102
    %p109 = scmp.eq.s32.totalorder %s15, 1
    %p110 = por %p108, %p109
    %p111 = scmp.ne.s32.totalorder %s102, %s103
    %p112 = scmp.eq.s32.totalorder %s15, 0
    %p113 = por %p111, %p112
    %p114 = scmp.ne.s32.totalorder %s102, %s103
    %p115 = scmp.eq.s32.totalorder %s16, 1
    %p116 = por %p114, %p115
    %p118 = scmp.ne.s32.totalorder %s103, %s117
    %p119 = scmp.eq.s32.totalorder %s16, 0
    %p120 = por %p118, %p119
    %s121 = ssub.s32 %s17, %s29
    %p122 = scmp.eq.s32.totalorder %s121, 0
    %s124 = sadd.s32 %s123, 1
    %s125 = scalar_select %p122, %s123, %s124
    %p128 = pneg %p122
    %p129 = scmp.eq.s32.totalorder %s10, 1
    %p130 = por %p128, %p129
    %p131 = scmp.ne.s32.totalorder %s123, %s126
    %p132 = scmp.eq.s32.totalorder %s10, 0
    %p133 = por %p131, %p132
    %p134 = scmp.ne.s32.totalorder %s123, %s126
    %p135 = scmp.eq.s32.totalorder %s15, 1
    %p136 = por %p134, %p135
    %p137 = scmp.ne.s32.totalorder %s126, %s127
    %p138 = scmp.eq.s32.totalorder %s15, 0
    %p139 = por %p137, %p138
    %p140 = scmp.ne.s32.totalorder %s126, %s127
    %p141 = scmp.eq.s32.totalorder %s16, 1
    %p142 = por %p140, %p141
    %p144 = scmp.ne.s32.totalorder %s127, %s143
    %p145 = scmp.eq.s32.totalorder %s16, 0
    %p146 = por %p144, %p145
    %p147 = scmp.le.s32.totalorder 1, %s10
    %p148 = scmp.lt.s32.totalorder %s10, 3
    %p149 = pnand %p147, %p148
    %p150 = pneg %p149
    // Predicated region
    $region9: #{fedgsl_gcn_forward.2} parent=5 // pred_check
      _
    $region10: #{fedgsl_gcn_forward.2} parent=5 // pred_check_branch
      %152 = sbr.rel (%p149) target = $region12
    $region11: #{fedgsl_gcn_forward.2} parent=5 // pred_region
      %s153 = ssub.s32 %s10, 1
      // Predicated region
      $region13: #{fedgsl_gcn_forward.2} parent=11 // pred_check
        %p154 = pneg %p71
      $region14: #{fedgsl_gcn_forward.2} parent=11 // pred_check_branch
        %156 = sbr.rel (%p154) target = $region16
      $region15: #{fedgsl_gcn_forward.2} parent=11 // pred_region
        _
      $region16: #{fedgsl_gcn_forward.2} parent=11 // pred_fallthru
        _
      // Predicated region
      $region17: #{fedgsl_gcn_forward.2} parent=11 // pred_check
        %p157 = pneg %p92
      $region18: #{fedgsl_gcn_forward.2} parent=11 // pred_check_branch
        %159 = sbr.rel (%p157) target = $region20
      $region19: #{fedgsl_gcn_forward.2} parent=11 // pred_region
        _
      $region20: #{fedgsl_gcn_forward.2} parent=11 // pred_fallthru
        _
      // Predicated region
      $region21: #{fedgsl_gcn_forward.2} parent=11 // pred_check
        %p160 = pneg %p113
      $region22: #{fedgsl_gcn_forward.2} parent=11 // pred_check_branch
        %162 = sbr.rel (%p160) target = $region24
      $region23: #{fedgsl_gcn_forward.2} parent=11 // pred_region
        _
      $region24: #{fedgsl_gcn_forward.2} parent=11 // pred_fallthru
        _
    $region12: #{fedgsl_gcn_forward.2} parent=5 // pred_fallthru
      _
    %p163 = scmp.lt.s32.totalorder %s10, 2
    // Predicated region
    $region25: #{fedgsl_gcn_forward.2} parent=5 // pred_check
      %p164 = pneg %p163
    $region26: #{fedgsl_gcn_forward.2} parent=5 // pred_check_branch
      %166 = sbr.rel (%p164) target = $region28
    $region27: #{fedgsl_gcn_forward.2} parent=5 // pred_region
      // Predicated region
      $region29: #{fedgsl_gcn_forward.2} parent=27 // pred_check
        %p167 = pneg %p44
      $region30: #{fedgsl_gcn_forward.2} parent=27 // pred_check_branch
        %169 = sbr.rel (%p167) target = $region32
      $region31: #{fedgsl_gcn_forward.2} parent=27 // pred_region
        %s170 = smul.u32 24, %s17
        %s171 = smul.u32 3, %s18
        %p172 = scmp.lt.s32.totalorder %s170, 47
        %s173 = scalar_select %p172, %s170, 47
        %p174 = scmp.lt.s32.totalorder %s171, 2
        %s175 = scalar_select %p174, %s171, 2
        %s176 = smul.addr %s173, 3
        %s177 = sadd.s32 %s175, %s176
        %s178 = smul.addr %s177, 4
        %s179 = scalar_lea.vmem %s0, %s178
        %s180 = smul.u32 24, %s17
        %s181 = smul.u32 3, %s18
      $region32: #{fedgsl_gcn_forward.2} parent=27 // pred_fallthru
        _
    $region28: #{fedgsl_gcn_forward.2} parent=5 // pred_fallthru
      _
    %p182 = scmp.le.s32.totalorder 1, %s10
    %p183 = scmp.lt.s32.totalorder %s10, 3
    %p184 = pnand %p182, %p183
    %p185 = pneg %p184
    // Predicated region
    $region33: #{fedgsl_gcn_forward.2} parent=5 // pred_check
      _
    $region34: #{fedgsl_gcn_forward.2} parent=5 // pred_check_branch
      %187 = sbr.rel (%p184) target = $region36
    $region35: #{fedgsl_gcn_forward.2} parent=5 // pred_region
      %s188 = ssub.s32 %s10, 1
      %s189 = smul.u32 24, %s19
      %s190 = smul.u32 3, %s20
      %p191 = scmp.lt.s32.totalorder %s189, 47
      %s192 = scalar_select %p191, %s189, 47
      %p193 = scmp.lt.s32.totalorder %s190, 2
      %s194 = scalar_select %p193, %s190, 2
      %s195 = smul.addr %s192, 3
      %s196 = sadd.s32 %s194, %s195
      %s197 = smul.addr %s196, 4
      %s198 = scalar_lea.vmem %s0, %s197
      %p199 = pneg %p50
      %p200 = pneg %p47
      %p201 = pneg %p71
      %p202 = pneg %p68
      %p203 = pneg %p92
      %p204 = pneg %p89
      %p205 = pneg %p113
      %p206 = pneg %p110
      %p207 = pneg %p139
      %p208 = pneg %p136
      %s209 = smul.u32 24, %s19
      %p210 = scmp.lt.s32.totalorder %s209, 47
      %s211 = scalar_select %p210, %s209, 47
      %s212 = smul.addr %s211, 4
      %s213 = scalar_lea.vmem %s4, %s212
      %s214 = smul.u32 24, %s19
      %s215 = smul.u32 3, %s20
      %p216 = scmp.lt.s32.totalorder %s214, 47
      %s217 = scalar_select %p216, %s214, 47
      %p218 = scmp.lt.s32.totalorder %s215, 2
      %s219 = scalar_select %p218, %s215, 2
      %s220 = smul.addr %s217, 3
      %s221 = sadd.s32 %s219, %s220
      %s222 = smul.addr %s221, 4
      %s223 = scalar_lea.vmem %s0, %s222
      %s224 = smul.u32 24, %s19
      %s225 = smul.u32 3, %s20
      %s226 = smul.u32 24, %s19
      %p227 = scmp.lt.s32.totalorder %s226, 47
      %s228 = scalar_select %p227, %s226, 47
      %s229 = smul.addr %s228, 4
      %s230 = scalar_lea.vmem %s4, %s229
      %s231 = smul.u32 24, %s19
      %v233 = vld [vmem:[%s1] sm:$0xf]
      %v234 = vld [vmem:[%s1 + $0x4] sm:$0xf]
      %v235 = vld [vmem:[%s1 + $0x8] sm:$0xf]
      %v236 = vld [vmem:[%s1 + $0xc] sm:$0xf]
      %v237 = vld [vmem:[%s1 + $0x10] sm:$0xf]
      %v238 = vld [vmem:[%s1 + $0x14] sm:$0xf]
      %v239 = vld [vmem:[%s1 + $0x18] sm:$0xf]
      %v240 = vld [vmem:[%s1 + $0x1c] sm:$0xf]
      %v241 = vld [vmem:[%s1 + $0x20] sm:$0xf]
      %v242 = vld [vmem:[%s1 + $0x24] sm:$0xf]
      %v243 = vld [vmem:[%s1 + $0x28] sm:$0xf]
      %v244 = vld [vmem:[%s1 + $0x2c] sm:$0xf]
      %v245 = vld [vmem:[%s1 + $0x30] sm:$0xf]
      %v246 = vld [vmem:[%s1 + $0x34] sm:$0xf]
      %v247 = vld [vmem:[%s1 + $0x38] sm:$0xf]
      %v248 = vld [vmem:[%s1 + $0x3c] sm:$0xf]
      %v249 = vld [vmem:[%s1 + $0x40] sm:$0xf]
      %v250 = vld [vmem:[%s1 + $0x44] sm:$0xf]
      %v251 = vld [vmem:[%s1 + $0x48] sm:$0xf]
      %v252 = vld [vmem:[%s1 + $0x4c] sm:$0xf]
      %v253 = vld [vmem:[%s1 + $0x50] sm:$0xf]
      %v254 = vld [vmem:[%s1 + $0x54] sm:$0xf]
      %v255 = vld [vmem:[%s1 + $0x58] sm:$0xf]
      %v256 = vld [vmem:[%s1 + $0x5c] sm:$0xf]
      %v257 = vld [vmem:[%s1 + $0x60] sm:$0xf]
      %v258 = vld [vmem:[%s1 + $0x64] sm:$0xf]
      %v259 = vld [vmem:[%s1 + $0x68] sm:$0xf]
      %v260 = vld [vmem:[%s1 + $0x6c] sm:$0xf]
      %v261 = vld [vmem:[%s1 + $0x70] sm:$0xf]
      %v262 = vld [vmem:[%s1 + $0x74] sm:$0xf]
      %v263 = vld [vmem:[%s1 + $0x78] sm:$0xf]
      %v264 = vld [vmem:[%s1 + $0x7c] sm:$0xf]
      %v265 = vld [vmem:[%s1 + $0x80] sm:$0xf]
      %v266 = vld [vmem:[%s1 + $0x84] sm:$0xf]
      %v267 = vld [vmem:[%s1 + $0x88] sm:$0xf]
      %v268 = vld [vmem:[%s1 + $0x8c] sm:$0xf]
      %v269 = vld [vmem:[%s1 + $0x90] sm:$0xf]
      %v270 = vld [vmem:[%s1 + $0x94] sm:$0xf]
      %v271 = vld [vmem:[%s1 + $0x98] sm:$0xf]
      %v272 = vld [vmem:[%s1 + $0x9c] sm:$0xf]
      %v273 = vld [vmem:[%s1 + $0xa0] sm:$0xf]
      %v274 = vld [vmem:[%s1 + $0xa4] sm:$0xf]
      %v275 = vld [vmem:[%s1 + $0xa8] sm:$0xf]
      %v276 = vld [vmem:[%s1 + $0xac] sm:$0xf]
      %v277 = vld [vmem:[%s1 + $0xb0] sm:$0xf]
      %v278 = vld [vmem:[%s1 + $0xb4] sm:$0xf]
      %v279 = vld [vmem:[%s1 + $0xb8] sm:$0xf]
      %v280 = vld [vmem:[%s1 + $0xbc] sm:$0xf]
      %v281 = vld [vmem:[%s223] sm:$0xff]
      %v282 = vld [vmem:[%s223 + $0x8] sm:$0xf]
      %v283 = vld [vmem:[%s223 + $0xc] sm:$0xff]
      %v284 = vld [vmem:[%s223 + $0x14] sm:$0xf]
      %v285 = vld [vmem:[%s223 + $0x18] sm:$0xff]
      %v286 = vld [vmem:[%s223 + $0x20] sm:$0xf]
      %v287 = vld [vmem:[%s223 + $0x24] sm:$0xff]
      %v288 = vld [vmem:[%s223 + $0x2c] sm:$0xf]
      %v289 = vld [vmem:[%s223 + $0x30] sm:$0xff]
      %v290 = vld [vmem:[%s223 + $0x38] sm:$0xf]
      %v291 = vld [vmem:[%s223 + $0x3c] sm:$0xff]
      %v292 = vld [vmem:[%s223 + $0x44] sm:$0xf]
      %v293 = vld [vmem:[%s223 + $0x48] sm:$0xff]
      %v294 = vld [vmem:[%s223 + $0x50] sm:$0xf]
      %v295 = vld [vmem:[%s223 + $0x54] sm:$0xff]
      %v296 = vld [vmem:[%s223 + $0x5c] sm:$0xf]
      %v297 = vld [vmem:[%s223 + $0x60] sm:$0xff]
      %v298 = vld [vmem:[%s223 + $0x68] sm:$0xf]
      %v299 = vld [vmem:[%s223 + $0x6c] sm:$0xff]
      %v300 = vld [vmem:[%s223 + $0x74] sm:$0xf]
      %v301 = vld [vmem:[%s223 + $0x78] sm:$0xff]
      %v302 = vld [vmem:[%s223 + $0x80] sm:$0xf]
      %v303 = vld [vmem:[%s223 + $0x84] sm:$0xff]
      %v304 = vld [vmem:[%s223 + $0x8c] sm:$0xf]
      %v305 = vld [vmem:[%s223 + $0x90] sm:$0xff]
      %v306 = vld [vmem:[%s223 + $0x98] sm:$0xf]
      %v307 = vld [vmem:[%s223 + $0x9c] sm:$0xff]
      %v308 = vld [vmem:[%s223 + $0xa4] sm:$0xf]
      %v309 = vld [vmem:[%s223 + $0xa8] sm:$0xff]
      %v310 = vld [vmem:[%s223 + $0xb0] sm:$0xf]
      %v311 = vld [vmem:[%s223 + $0xb4] sm:$0xff]
      %v312 = vld [vmem:[%s223 + $0xbc] sm:$0xf]
      %v313 = vld [vmem:[%s223 + $0xc0] sm:$0xff]
      %v314 = vld [vmem:[%s223 + $0xc8] sm:$0xf]
      %v315 = vld [vmem:[%s223 + $0xcc] sm:$0xff]
      %v316 = vld [vmem:[%s223 + $0xd4] sm:$0xf]
      %v317 = vld [vmem:[%s223 + $0xd8] sm:$0xff]
      %v318 = vld [vmem:[%s223 + $0xe0] sm:$0xf]
      %v319 = vld [vmem:[%s223 + $0xe4] sm:$0xff]
      %v320 = vld [vmem:[%s223 + $0xec] sm:$0xf]
      %v321 = vld [vmem:[%s223 + $0xf0] sm:$0xff]
      %v322 = vld [vmem:[%s223 + $0xf8] sm:$0xf]
      %v323 = vld [vmem:[%s223 + $0xfc] sm:$0xff]
      %v324 = vld [vmem:[%s223 + $0x104] sm:$0xf]
      %v325 = vld [vmem:[%s223 + $0x108] sm:$0xff]
      %v326 = vld [vmem:[%s223 + $0x110] sm:$0xf]
      %v327 = vld [vmem:[%s223 + $0x114] sm:$0xff]
      %v328 = vld [vmem:[%s223 + $0x11c] sm:$0xf]
      %v377 = vunpack.c.l.b16 %v281
      %v378 = vunpack.c.h.b16 %v281
      %v379 = vunpack.c.l.b16 %v282
      %v380 = vunpack.c.l.b16 %v283
      %v381 = vunpack.c.h.b16 %v283
      %v382 = vunpack.c.l.b16 %v284
      %v383 = vunpack.c.l.b16 %v285
      %v384 = vunpack.c.h.b16 %v285
      %v385 = vunpack.c.l.b16 %v286
      %v386 = vunpack.c.l.b16 %v287
      %v387 = vunpack.c.h.b16 %v287
      %v388 = vunpack.c.l.b16 %v288
      %v389 = vunpack.c.l.b16 %v289
      %v390 = vunpack.c.h.b16 %v289
      %v391 = vunpack.c.l.b16 %v290
      %v392 = vunpack.c.l.b16 %v291
      %v393 = vunpack.c.h.b16 %v291
      %v394 = vunpack.c.l.b16 %v292
      %v395 = vunpack.c.l.b16 %v293
      %v396 = vunpack.c.h.b16 %v293
      %v397 = vunpack.c.l.b16 %v294
      %v398 = vunpack.c.l.b16 %v295
      %v399 = vunpack.c.h.b16 %v295
      %v400 = vunpack.c.l.b16 %v296
      %v401 = vunpack.c.l.b16 %v297
      %v402 = vunpack.c.h.b16 %v297
      %v403 = vunpack.c.l.b16 %v298
      %v404 = vunpack.c.l.b16 %v299
      %v405 = vunpack.c.h.b16 %v299
      %v406 = vunpack.c.l.b16 %v300
      %v407 = vunpack.c.l.b16 %v301
      %v408 = vunpack.c.h.b16 %v301
      %v409 = vunpack.c.l.b16 %v302
      %v410 = vunpack.c.l.b16 %v303
      %v411 = vunpack.c.h.b16 %v303
      %v412 = vunpack.c.l.b16 %v304
      %v413 = vunpack.c.l.b16 %v305
      %v414 = vunpack.c.h.b16 %v305
      %v415 = vunpack.c.l.b16 %v306
      %v416 = vunpack.c.l.b16 %v307
      %v417 = vunpack.c.h.b16 %v307
      %v418 = vunpack.c.l.b16 %v308
      %v419 = vunpack.c.l.b16 %v309
      %v420 = vunpack.c.h.b16 %v309
      %v421 = vunpack.c.l.b16 %v310
      %v422 = vunpack.c.l.b16 %v311
      %v423 = vunpack.c.h.b16 %v311
      %v424 = vunpack.c.l.b16 %v312
      %v425 = vunpack.c.l.b16 %v313
      %v426 = vunpack.c.h.b16 %v313
      %v427 = vunpack.c.l.b16 %v314
      %v428 = vunpack.c.l.b16 %v315
      %v429 = vunpack.c.h.b16 %v315
      %v430 = vunpack.c.l.b16 %v316
      %v431 = vunpack.c.l.b16 %v317
      %v432 = vunpack.c.h.b16 %v317
      %v433 = vunpack.c.l.b16 %v318
      %v434 = vunpack.c.l.b16 %v319
      %v435 = vunpack.c.h.b16 %v319
      %v436 = vunpack.c.l.b16 %v320
      %v437 = vunpack.c.l.b16 %v321
      %v438 = vunpack.c.h.b16 %v321
      %v439 = vunpack.c.l.b16 %v322
      %v440 = vunpack.c.l.b16 %v323
      %v441 = vunpack.c.h.b16 %v323
      %v442 = vunpack.c.l.b16 %v324
      %v443 = vunpack.c.l.b16 %v325
      %v444 = vunpack.c.h.b16 %v325
      %v445 = vunpack.c.l.b16 %v326
      %v446 = vunpack.c.l.b16 %v327
      %v447 = vunpack.c.h.b16 %v327
      %v448 = vunpack.c.l.b16 %v328
      %v449 = vpack.c.b16 %v380, %v377
      %v450 = vpack.c.b16 %v381, %v378
      %v451 = vpack.c.b16 %v382, %v379
      %v452 = vpack.c.b16 %v386, %v383
      %v453 = vpack.c.b16 %v387, %v384
      %v454 = vpack.c.b16 %v388, %v385
      %v455 = vpack.c.b16 %v392, %v389
      %v456 = vpack.c.b16 %v393, %v390
      %v457 = vpack.c.b16 %v394, %v391
      %v458 = vpack.c.b16 %v398, %v395
      %v459 = vpack.c.b16 %v399, %v396
      %v460 = vpack.c.b16 %v400, %v397
      %v461 = vpack.c.b16 %v404, %v401
      %v462 = vpack.c.b16 %v405, %v402
      %v463 = vpack.c.b16 %v406, %v403
      %v464 = vpack.c.b16 %v410, %v407
      %v465 = vpack.c.b16 %v411, %v408
      %v466 = vpack.c.b16 %v412, %v409
      %v467 = vpack.c.b16 %v416, %v413
      %v468 = vpack.c.b16 %v417, %v414
      %v469 = vpack.c.b16 %v418, %v415
      %v470 = vpack.c.b16 %v422, %v419
      %v471 = vpack.c.b16 %v423, %v420
      %v472 = vpack.c.b16 %v424, %v421
      %v473 = vpack.c.b16 %v428, %v425
      %v474 = vpack.c.b16 %v429, %v426
      %v475 = vpack.c.b16 %v430, %v427
      %v476 = vpack.c.b16 %v434, %v431
      %v477 = vpack.c.b16 %v435, %v432
      %v478 = vpack.c.b16 %v436, %v433
      %v479 = vpack.c.b16 %v440, %v437
      %v480 = vpack.c.b16 %v441, %v438
      %v481 = vpack.c.b16 %v442, %v439
      %v482 = vpack.c.b16 %v446, %v443
      %v483 = vpack.c.b16 %v447, %v444
      %v484 = vpack.c.b16 %v448, %v445
      %v569 = vunpack.c.l.b16 %v233
      %v570 = vunpack.c.l.b16 %v234
      %v571 = vunpack.c.l.b16 %v235
      %v572 = vunpack.c.l.b16 %v236
      %v573 = vunpack.c.l.b16 %v237
      %v574 = vunpack.c.l.b16 %v238
      %v575 = vunpack.c.l.b16 %v239
      %v576 = vunpack.c.l.b16 %v240
      %v577 = vunpack.c.l.b16 %v241
      %v578 = vunpack.c.l.b16 %v242
      %v579 = vunpack.c.l.b16 %v243
      %v580 = vunpack.c.l.b16 %v244
      %v581 = vunpack.c.l.b16 %v245
      %v582 = vunpack.c.l.b16 %v246
      %v583 = vunpack.c.l.b16 %v247
      %v584 = vunpack.c.l.b16 %v248
      %v585 = vunpack.c.l.b16 %v249
      %v586 = vunpack.c.l.b16 %v250
      %v587 = vunpack.c.l.b16 %v251
      %v588 = vunpack.c.l.b16 %v252
      %v589 = vunpack.c.l.b16 %v253
      %v590 = vunpack.c.l.b16 %v254
      %v591 = vunpack.c.l.b16 %v255
      %v592 = vunpack.c.l.b16 %v256
      %v593 = vunpack.c.l.b16 %v257
      %v594 = vunpack.c.l.b16 %v258
      %v595 = vunpack.c.l.b16 %v259
      %v596 = vunpack.c.l.b16 %v260
      %v597 = vunpack.c.l.b16 %v261
      %v598 = vunpack.c.l.b16 %v262
      %v599 = vunpack.c.l.b16 %v263
      %v600 = vunpack.c.l.b16 %v264
      %v601 = vunpack.c.l.b16 %v265
      %v602 = vunpack.c.l.b16 %v266
      %v603 = vunpack.c.l.b16 %v267
      %v604 = vunpack.c.l.b16 %v268
      %v605 = vunpack.c.l.b16 %v269
      %v606 = vunpack.c.l.b16 %v270
      %v607 = vunpack.c.l.b16 %v271
      %v608 = vunpack.c.l.b16 %v272
      %v609 = vunpack.c.l.b16 %v273
      %v610 = vunpack.c.l.b16 %v274
      %v611 = vunpack.c.l.b16 %v275
      %v612 = vunpack.c.l.b16 %v276
      %v613 = vunpack.c.l.b16 %v277
      %v614 = vunpack.c.l.b16 %v278
      %v615 = vunpack.c.l.b16 %v279
      %v616 = vunpack.c.l.b16 %v280
      %v617 = vpack.c.b16 %v570, %v569
      %v618 = vpack.c.b16 %v572, %v571
      %v619 = vpack.c.b16 %v574, %v573
      %v620 = vpack.c.b16 %v576, %v575
      %v621 = vpack.c.b16 %v578, %v577
      %v622 = vpack.c.b16 %v580, %v579
      %v623 = vpack.c.b16 %v582, %v581
      %v624 = vpack.c.b16 %v584, %v583
      %v625 = vpack.c.b16 %v586, %v585
      %v626 = vpack.c.b16 %v588, %v587
      %v627 = vpack.c.b16 %v590, %v589
      %v628 = vpack.c.b16 %v592, %v591
      %v629 = vpack.c.b16 %v594, %v593
      %v630 = vpack.c.b16 %v596, %v595
      %v631 = vpack.c.b16 %v598, %v597
      %v632 = vpack.c.b16 %v600, %v599
      %v633 = vpack.c.b16 %v602, %v601
      %v634 = vpack.c.b16 %v604, %v603
      %v635 = vpack.c.b16 %v606, %v605
      %v636 = vpack.c.b16 %v608, %v607
      %v637 = vpack.c.b16 %v610, %v609
      %v638 = vpack.c.b16 %v612, %v611
      %v639 = vpack.c.b16 %v614, %v613
      %v640 = vpack.c.b16 %v616, %v615
      %665 = vmatprep.subr.bf16.mxu0 0
      %666 = vmatpush1.bf16.msra.mxu0 %v624
      %667 = vmatprep.subr.bf16.mxu0 0
      %668 = vmatpush1.bf16.msra.mxu0 %v623
      %669 = vmatprep.subr.bf16.mxu0 0
      %670 = vmatpush1.bf16.msra.mxu0 %v622
      %671 = vmatprep.subr.bf16.mxu0 0
      %672 = vmatpush1.bf16.msra.mxu0 %v621
      %673 = vmatprep.subr.bf16.mxu0 0
      %674 = vmatpush1.bf16.msra.mxu0 %v620
      %675 = vmatprep.subr.bf16.mxu0 0
      %676 = vmatpush1.bf16.msra.mxu0 %v619
      %677 = vmatprep.subr.bf16.mxu0 0
      %678 = vmatpush1.bf16.msra.mxu0 %v618
      %679 = vmatprep.subr.bf16.mxu0 0
      %680 = vmatpush1.bf16.msra.mxu0 %v617
      %681 = vmatprep.subr.bf16.mxu0 0
      %682 = vmatpush2.bf16.msra.mxu0 %v632
      %683 = vmatprep.subr.bf16.mxu0 0
      %684 = vmatpush2.bf16.msra.mxu0 %v631
      %685 = vmatprep.subr.bf16.mxu0 0
      %686 = vmatpush2.bf16.msra.mxu0 %v630
      %687 = vmatprep.subr.bf16.mxu0 0
      %688 = vmatpush2.bf16.msra.mxu0 %v629
      %689 = vmatprep.subr.bf16.mxu0 0
      %690 = vmatpush2.bf16.msra.mxu0 %v628
      %691 = vmatprep.subr.bf16.mxu0 0
      %692 = vmatpush2.bf16.msra.mxu0 %v627
      %693 = vmatprep.subr.bf16.mxu0 0
      %694 = vmatpush2.bf16.msra.mxu0 %v626
      %695 = vmatprep.subr.bf16.mxu0 0
      %696 = vmatpush2.bf16.msra.mxu0 %v625
      %697 = vmatprep.mubr.bf16.mxu0 %v450
      %698 = vmatmul.mubr.bf16.gmra.mxu0 %v449
      %v699 = vpop.f32.mrf.mxu0
      %v700 = vadd.f32 0.0, %v699
      %v701 = vpop.f32.mrf.mxu0
      %v702 = vpop.f32.mrf.mxu0
      %v703 = vadd.f32 0.0, %v702
      %v704 = vpop.f32.mrf.mxu0
      %705 = vmatprep.mubr.bf16.mxu0 %v453
      %706 = vmatmul.mubr.bf16.gmra.mxu0 %v452
      %v707 = vpop.f32.mrf.mxu0
      %v708 = vadd.f32 0.0, %v707
      %v709 = vpop.f32.mrf.mxu0
      %v710 = vpop.f32.mrf.mxu0
      %v711 = vadd.f32 0.0, %v710
      %v712 = vpop.f32.mrf.mxu0
      %713 = vmatprep.mubr.bf16.mxu0 %v456
      %714 = vmatmul.mubr.bf16.gmra.mxu0 %v455
      %v715 = vpop.f32.mrf.mxu0
      %v716 = vadd.f32 0.0, %v715
      %v717 = vpop.f32.mrf.mxu0
      %v718 = vpop.f32.mrf.mxu0
      %v719 = vadd.f32 0.0, %v718
      %v720 = vpop.f32.mrf.mxu0
      %721 = vmatprep.mubr.bf16.mxu0 %v459
      %722 = vmatmul.mubr.bf16.gmra.mxu0 %v458
      %v723 = vpop.f32.mrf.mxu0
      %v724 = vadd.f32 0.0, %v723
      %v725 = vpop.f32.mrf.mxu0
      %v726 = vpop.f32.mrf.mxu0
      %v727 = vadd.f32 0.0, %v726
      %v728 = vpop.f32.mrf.mxu0
      %729 = vmatprep.mubr.bf16.mxu0 %v462
      %730 = vmatmul.mubr.bf16.gmra.mxu0 %v461
      %v731 = vpop.f32.mrf.mxu0
      %v732 = vadd.f32 0.0, %v731
      %v733 = vpop.f32.mrf.mxu0
      %v734 = vpop.f32.mrf.mxu0
      %v735 = vadd.f32 0.0, %v734
      %v736 = vpop.f32.mrf.mxu0
      %737 = vmatprep.mubr.bf16.mxu0 %v465
      %738 = vmatmul.mubr.bf16.gmra.mxu0 %v464
      %v739 = vpop.f32.mrf.mxu0
      %v740 = vadd.f32 0.0, %v739
      %v741 = vpop.f32.mrf.mxu0
      %v742 = vpop.f32.mrf.mxu0
      %v743 = vadd.f32 0.0, %v742
      %v744 = vpop.f32.mrf.mxu0
      %745 = vmatprep.mubr.bf16.mxu0 %v468
      %746 = vmatmul.mubr.bf16.gmra.mxu0 %v467
      %v747 = vpop.f32.mrf.mxu0
      %v748 = vadd.f32 0.0, %v747
      %v749 = vpop.f32.mrf.mxu0
      %v750 = vpop.f32.mrf.mxu0
      %v751 = vadd.f32 0.0, %v750
      %v752 = vpop.f32.mrf.mxu0
      %753 = vmatprep.mubr.bf16.mxu0 %v471
      %754 = vmatmul.mubr.bf16.gmra.mxu0 %v470
      %v755 = vpop.f32.mrf.mxu0
      %v756 = vadd.f32 0.0, %v755
      %v757 = vpop.f32.mrf.mxu0
      %v758 = vpop.f32.mrf.mxu0
      %v759 = vadd.f32 0.0, %v758
      %v760 = vpop.f32.mrf.mxu0
      %761 = vmatprep.mubr.bf16.mxu0 %v474
      %762 = vmatmul.mubr.bf16.gmra.mxu0 %v473
      %v763 = vpop.f32.mrf.mxu0
      %v764 = vadd.f32 0.0, %v763
      %v765 = vpop.f32.mrf.mxu0
      %v766 = vpop.f32.mrf.mxu0
      %v767 = vadd.f32 0.0, %v766
      %v768 = vpop.f32.mrf.mxu0
      %769 = vmatprep.mubr.bf16.mxu0 %v477
      %770 = vmatmul.mubr.bf16.gmra.mxu0 %v476
      %v771 = vpop.f32.mrf.mxu0
      %v772 = vadd.f32 0.0, %v771
      %v773 = vpop.f32.mrf.mxu0
      %v774 = vpop.f32.mrf.mxu0
      %v775 = vadd.f32 0.0, %v774
      %v776 = vpop.f32.mrf.mxu0
      %777 = vmatprep.mubr.bf16.mxu0 %v480
      %778 = vmatmul.mubr.bf16.gmra.mxu0 %v479
      %v779 = vpop.f32.mrf.mxu0
      %v780 = vadd.f32 0.0, %v779
      %v781 = vpop.f32.mrf.mxu0
      %v782 = vpop.f32.mrf.mxu0
      %v783 = vadd.f32 0.0, %v782
      %v784 = vpop.f32.mrf.mxu0
      %785 = vmatprep.mubr.bf16.mxu0 %v483
      %786 = vmatmul.mubr.bf16.gmra.mxu0 %v482
      %v787 = vpop.f32.mrf.mxu0
      %v788 = vadd.f32 0.0, %v787
      %v789 = vpop.f32.mrf.mxu0
      %v790 = vpop.f32.mrf.mxu0
      %v791 = vadd.f32 0.0, %v790
      %v792 = vpop.f32.mrf.mxu0
      %793 = vdwg.mxu0
      %794 = vmatprep.subr.bf16.mxu0 0
      %795 = vmatpush1.bf16.msra.mxu0 %v640
      %796 = vmatprep.subr.bf16.mxu0 0
      %797 = vmatpush1.bf16.msra.mxu0 %v639
      %798 = vmatprep.subr.bf16.mxu0 0
      %799 = vmatpush1.bf16.msra.mxu0 %v638
      %800 = vmatprep.subr.bf16.mxu0 0
      %801 = vmatpush1.bf16.msra.mxu0 %v637
      %802 = vmatprep.subr.bf16.mxu0 0
      %803 = vmatpush1.bf16.msra.mxu0 %v636
      %804 = vmatprep.subr.bf16.mxu0 0
      %805 = vmatpush1.bf16.msra.mxu0 %v635
      %806 = vmatprep.subr.bf16.mxu0 0
      %807 = vmatpush1.bf16.msra.mxu0 %v634
      %808 = vmatprep.subr.bf16.mxu0 0
      %809 = vmatpush1.bf16.msra.mxu0 %v633
      %810 = vmatprep.subr.bf16.mxu0 0
      %811 = vmatpush2.bf16.msra.mxu0 0
      %812 = vmatprep.subr.bf16.mxu0 0
      %813 = vmatpush2.bf16.msra.mxu0 0
      %814 = vmatprep.subr.bf16.mxu0 0
      %815 = vmatpush2.bf16.msra.mxu0 0
      %816 = vmatprep.subr.bf16.mxu0 0
      %817 = vmatpush2.bf16.msra.mxu0 0
      %818 = vmatprep.subr.bf16.mxu0 0
      %819 = vmatpush2.bf16.msra.mxu0 0
      %820 = vmatprep.subr.bf16.mxu0 0
      %821 = vmatpush2.bf16.msra.mxu0 0
      %822 = vmatprep.subr.bf16.mxu0 0
      %823 = vmatpush2.bf16.msra.mxu0 0
      %824 = vmatprep.subr.bf16.mxu0 0
      %825 = vmatpush2.bf16.msra.mxu0 0
      %826 = vmatprep.mubr.bf16.mxu0 0
      %827 = vmatmul.mubr.bf16.gmra.mxu0 %v451
      %v828 = vpop.f32.mrf.mxu0
      %v829 = vadd.f32 %v700, %v828
      %v830 = vpop.f32.mrf.mxu0
      %v831 = vpop.f32.mrf.mxu0
      %v832 = vadd.f32 %v703, %v831
      %v833 = vpop.f32.mrf.mxu0
      %834 = vmatprep.mubr.bf16.mxu0 0
      %835 = vmatmul.mubr.bf16.gmra.mxu0 %v454
      %v836 = vpop.f32.mrf.mxu0
      %v837 = vadd.f32 %v708, %v836
      %v838 = vpop.f32.mrf.mxu0
      %v839 = vpop.f32.mrf.mxu0
      %v840 = vadd.f32 %v711, %v839
      %v841 = vpop.f32.mrf.mxu0
      %842 = vmatprep.mubr.bf16.mxu0 0
      %843 = vmatmul.mubr.bf16.gmra.mxu0 %v457
      %v844 = vpop.f32.mrf.mxu0
      %v845 = vadd.f32 %v716, %v844
      %v846 = vpop.f32.mrf.mxu0
      %v847 = vpop.f32.mrf.mxu0
      %v848 = vadd.f32 %v719, %v847
      %v849 = vpop.f32.mrf.mxu0
      %850 = vmatprep.mubr.bf16.mxu0 0
      %851 = vmatmul.mubr.bf16.gmra.mxu0 %v460
      %v852 = vpop.f32.mrf.mxu0
      %v853 = vadd.f32 %v724, %v852
      %v854 = vpop.f32.mrf.mxu0
      %v855 = vpop.f32.mrf.mxu0
      %v856 = vadd.f32 %v727, %v855
      %v857 = vpop.f32.mrf.mxu0
      %858 = vmatprep.mubr.bf16.mxu0 0
      %859 = vmatmul.mubr.bf16.gmra.mxu0 %v463
      %v860 = vpop.f32.mrf.mxu0
      %v861 = vadd.f32 %v732, %v860
      %v862 = vpop.f32.mrf.mxu0
      %v863 = vpop.f32.mrf.mxu0
      %v864 = vadd.f32 %v735, %v863
      %v865 = vpop.f32.mrf.mxu0
      %866 = vmatprep.mubr.bf16.mxu0 0
      %867 = vmatmul.mubr.bf16.gmra.mxu0 %v466
      %v868 = vpop.f32.mrf.mxu0
      %v869 = vadd.f32 %v740, %v868
      %v870 = vpop.f32.mrf.mxu0
      %v871 = vpop.f32.mrf.mxu0
      %v872 = vadd.f32 %v743, %v871
      %v873 = vpop.f32.mrf.mxu0
      %874 = vmatprep.mubr.bf16.mxu0 0
      %875 = vmatmul.mubr.bf16.gmra.mxu0 %v469
      %v876 = vpop.f32.mrf.mxu0
      %v877 = vadd.f32 %v748, %v876
      %v878 = vpop.f32.mrf.mxu0
      %v879 = vpop.f32.mrf.mxu0
      %v880 = vadd.f32 %v751, %v879
      %v881 = vpop.f32.mrf.mxu0
      %882 = vmatprep.mubr.bf16.mxu0 0
      %883 = vmatmul.mubr.bf16.gmra.mxu0 %v472
      %v884 = vpop.f32.mrf.mxu0
      %v885 = vadd.f32 %v756, %v884
      %v886 = vpop.f32.mrf.mxu0
      %v887 = vpop.f32.mrf.mxu0
      %v888 = vadd.f32 %v759, %v887
      %v889 = vpop.f32.mrf.mxu0
      %890 = vmatprep.mubr.bf16.mxu0 0
      %891 = vmatmul.mubr.bf16.gmra.mxu0 %v475
      %v892 = vpop.f32.mrf.mxu0
      %v893 = vadd.f32 %v764, %v892
      %v894 = vpop.f32.mrf.mxu0
      %v895 = vpop.f32.mrf.mxu0
      %v896 = vadd.f32 %v767, %v895
      %v897 = vpop.f32.mrf.mxu0
      %898 = vmatprep.mubr.bf16.mxu0 0
      %899 = vmatmul.mubr.bf16.gmra.mxu0 %v478
      %v900 = vpop.f32.mrf.mxu0
      %v901 = vadd.f32 %v772, %v900
      %v902 = vpop.f32.mrf.mxu0
      %v903 = vpop.f32.mrf.mxu0
      %v904 = vadd.f32 %v775, %v903
      %v905 = vpop.f32.mrf.mxu0
      %906 = vmatprep.mubr.bf16.mxu0 0
      %907 = vmatmul.mubr.bf16.gmra.mxu0 %v481
      %v908 = vpop.f32.mrf.mxu0
      %v909 = vadd.f32 %v780, %v908
      %v910 = vpop.f32.mrf.mxu0
      %v911 = vpop.f32.mrf.mxu0
      %v912 = vadd.f32 %v783, %v911
      %v913 = vpop.f32.mrf.mxu0
      %914 = vmatprep.mubr.bf16.mxu0 0
      %915 = vmatmul.mubr.bf16.gmra.mxu0 %v484
      %v916 = vpop.f32.mrf.mxu0
      %v917 = vadd.f32 %v788, %v916
      %v918 = vpop.f32.mrf.mxu0
      %v919 = vpop.f32.mrf.mxu0
      %v920 = vadd.f32 %v791, %v919
      %v921 = vpop.f32.mrf.mxu0
      %922 = vdwg.mxu0
      %v923 = vpack.c.bf16 %v832, %v829
      %v924 = vpack.c.bf16 %v840, %v837
      %v925 = vpack.c.bf16 %v848, %v845
      %v926 = vpack.c.bf16 %v856, %v853
      %v927 = vpack.c.bf16 %v864, %v861
      %v928 = vpack.c.bf16 %v872, %v869
      %v929 = vpack.c.bf16 %v880, %v877
      %v930 = vpack.c.bf16 %v888, %v885
      %v931 = vpack.c.bf16 %v896, %v893
      %v932 = vpack.c.bf16 %v904, %v901
      %v933 = vpack.c.bf16 %v912, %v909
      %v934 = vpack.c.bf16 %v920, %v917
      %v935 = vld [vmem:[%s2] sm:$0xf]
      %v936 = vld [vmem:[%s2 + $0x4] sm:$0xf]
      %v937 = vld [vmem:[%s2 + $0x8] sm:$0xf]
      %v938 = vld [vmem:[%s2 + $0xc] sm:$0xf]
      %v939 = vld [vmem:[%s2 + $0x10] sm:$0xf]
      %v940 = vld [vmem:[%s2 + $0x14] sm:$0xf]
      %v941 = vld [vmem:[%s2 + $0x18] sm:$0xf]
      %v942 = vld [vmem:[%s2 + $0x1c] sm:$0xf]
      %v943 = vld [vmem:[%s2 + $0x20] sm:$0xf]
      %v944 = vld [vmem:[%s2 + $0x24] sm:$0xf]
      %v945 = vld [vmem:[%s2 + $0x28] sm:$0xf]
      %v946 = vld [vmem:[%s2 + $0x2c] sm:$0xf]
      %v947 = vld [vmem:[%s2 + $0x30] sm:$0xf]
      %v948 = vld [vmem:[%s2 + $0x34] sm:$0xf]
      %v949 = vld [vmem:[%s2 + $0x38] sm:$0xf]
      %v950 = vld [vmem:[%s2 + $0x3c] sm:$0xf]
      %v951 = vld [vmem:[%s3] sm:$0x1]
      %v953 = vlaneseq
      %v954 = vshrl.u32 %v953, 7
      %v955 = vsub.s32 0, %v954
      %v956 = vrot.slane %v951, %v955
      %v974 = vunpack.c.l.b16 %v935
      %v975 = vunpack.c.l.b16 %v936
      %v976 = vunpack.c.l.b16 %v937
      %v977 = vunpack.c.l.b16 %v938
      %v978 = vunpack.c.l.b16 %v939
      %v979 = vunpack.c.l.b16 %v940
      %v980 = vunpack.c.l.b16 %v941
      %v981 = vunpack.c.l.b16 %v942
      %v982 = vunpack.c.l.b16 %v943
      %v983 = vunpack.c.l.b16 %v944
      %v984 = vunpack.c.l.b16 %v945
      %v985 = vunpack.c.l.b16 %v946
      %v986 = vunpack.c.l.b16 %v947
      %v987 = vunpack.c.l.b16 %v948
      %v988 = vunpack.c.l.b16 %v949
      %v989 = vunpack.c.l.b16 %v950
      %v990 = vpack.c.b16 %v975, %v974
      %v991 = vpack.c.b16 %v977, %v976
      %v992 = vpack.c.b16 %v979, %v978
      %v993 = vpack.c.b16 %v981, %v980
      %v994 = vpack.c.b16 %v983, %v982
      %v995 = vpack.c.b16 %v985, %v984
      %v996 = vpack.c.b16 %v987, %v986
      %v997 = vpack.c.b16 %v989, %v988
      %1006 = vmatprep.subr.bf16.mxu0 0
      %1007 = vmatpush1.bf16.msra.mxu0 %v997
      %1008 = vmatprep.subr.bf16.mxu0 0
      %1009 = vmatpush1.bf16.msra.mxu0 %v996
      %1010 = vmatprep.subr.bf16.mxu0 0
      %1011 = vmatpush1.bf16.msra.mxu0 %v995
      %1012 = vmatprep.subr.bf16.mxu0 0
      %1013 = vmatpush1.bf16.msra.mxu0 %v994
      %1014 = vmatprep.subr.bf16.mxu0 0
      %1015 = vmatpush1.bf16.msra.mxu0 %v993
      %1016 = vmatprep.subr.bf16.mxu0 0
      %1017 = vmatpush1.bf16.msra.mxu0 %v992
      %1018 = vmatprep.subr.bf16.mxu0 0
      %1019 = vmatpush1.bf16.msra.mxu0 %v991
      %1020 = vmatprep.subr.bf16.mxu0 0
      %1021 = vmatpush1.bf16.msra.mxu0 %v990
      %1022 = vmatprep.subr.bf16.mxu0 0
      %1023 = vmatpush2.bf16.msra.mxu0 0
      %1024 = vmatprep.subr.bf16.mxu0 0
      %1025 = vmatpush2.bf16.msra.mxu0 0
      %1026 = vmatprep.subr.bf16.mxu0 0
      %1027 = vmatpush2.bf16.msra.mxu0 0
      %1028 = vmatprep.subr.bf16.mxu0 0
      %1029 = vmatpush2.bf16.msra.mxu0 0
      %1030 = vmatprep.subr.bf16.mxu0 0
      %1031 = vmatpush2.bf16.msra.mxu0 0
      %1032 = vmatprep.subr.bf16.mxu0 0
      %1033 = vmatpush2.bf16.msra.mxu0 0
      %1034 = vmatprep.subr.bf16.mxu0 0
      %1035 = vmatpush2.bf16.msra.mxu0 0
      %1036 = vmatprep.subr.bf16.mxu0 0
      %1037 = vmatpush2.bf16.msra.mxu0 0
      %1038 = vmatprep.mubr.bf16.mxu0 0
      %1039 = vmatmul.mubr.bf16.gmra.mxu0 %v923
      %v1040 = vpop.f32.mrf.mxu0
      %v1041 = vadd.f32 %v956, %v1040
      %v1042 = vpop.f32.mrf.mxu0
      %v1043 = vpop.f32.mrf.mxu0
      %v1044 = vadd.f32 %v956, %v1043
      %v1045 = vpop.f32.mrf.mxu0
      %1046 = vmatprep.mubr.bf16.mxu0 0
      %1047 = vmatmul.mubr.bf16.gmra.mxu0 %v924
      %v1048 = vpop.f32.mrf.mxu0
      %v1049 = vadd.f32 %v956, %v1048
      %v1050 = vpop.f32.mrf.mxu0
      %v1051 = vpop.f32.mrf.mxu0
      %v1052 = vadd.f32 %v956, %v1051
      %v1053 = vpop.f32.mrf.mxu0
      %1054 = vmatprep.mubr.bf16.mxu0 0
      %1055 = vmatmul.mubr.bf16.gmra.mxu0 %v925
      %v1056 = vpop.f32.mrf.mxu0
      %v1057 = vadd.f32 %v956, %v1056
      %v1058 = vpop.f32.mrf.mxu0
      %v1059 = vpop.f32.mrf.mxu0
      %v1060 = vadd.f32 %v956, %v1059
      %v1061 = vpop.f32.mrf.mxu0
      %1062 = vmatprep.mubr.bf16.mxu0 0
      %1063 = vmatmul.mubr.bf16.gmra.mxu0 %v926
      %v1064 = vpop.f32.mrf.mxu0
      %v1065 = vadd.f32 %v956, %v1064
      %v1066 = vpop.f32.mrf.mxu0
      %v1067 = vpop.f32.mrf.mxu0
      %v1068 = vadd.f32 %v956, %v1067
      %v1069 = vpop.f32.mrf.mxu0
      %1070 = vmatprep.mubr.bf16.mxu0 0
      %1071 = vmatmul.mubr.bf16.gmra.mxu0 %v927
      %v1072 = vpop.f32.mrf.mxu0
      %v1073 = vadd.f32 %v956, %v1072
      %v1074 = vpop.f32.mrf.mxu0
      %v1075 = vpop.f32.mrf.mxu0
      %v1076 = vadd.f32 %v956, %v1075
      %v1077 = vpop.f32.mrf.mxu0
      %1078 = vmatprep.mubr.bf16.mxu0 0
      %1079 = vmatmul.mubr.bf16.gmra.mxu0 %v928
      %v1080 = vpop.f32.mrf.mxu0
      %v1081 = vadd.f32 %v956, %v1080
      %v1082 = vpop.f32.mrf.mxu0
      %v1083 = vpop.f32.mrf.mxu0
      %v1084 = vadd.f32 %v956, %v1083
      %v1085 = vpop.f32.mrf.mxu0
      %1086 = vmatprep.mubr.bf16.mxu0 0
      %1087 = vmatmul.mubr.bf16.gmra.mxu0 %v929
      %v1088 = vpop.f32.mrf.mxu0
      %v1089 = vadd.f32 %v956, %v1088
      %v1090 = vpop.f32.mrf.mxu0
      %v1091 = vpop.f32.mrf.mxu0
      %v1092 = vadd.f32 %v956, %v1091
      %v1093 = vpop.f32.mrf.mxu0
      %1094 = vmatprep.mubr.bf16.mxu0 0
      %1095 = vmatmul.mubr.bf16.gmra.mxu0 %v930
      %v1096 = vpop.f32.mrf.mxu0
      %v1097 = vadd.f32 %v956, %v1096
      %v1098 = vpop.f32.mrf.mxu0
      %v1099 = vpop.f32.mrf.mxu0
      %v1100 = vadd.f32 %v956, %v1099
      %v1101 = vpop.f32.mrf.mxu0
      %1102 = vmatprep.mubr.bf16.mxu0 0
      %1103 = vmatmul.mubr.bf16.gmra.mxu0 %v931
      %v1104 = vpop.f32.mrf.mxu0
      %v1105 = vadd.f32 %v956, %v1104
      %v1106 = vpop.f32.mrf.mxu0
      %v1107 = vpop.f32.mrf.mxu0
      %v1108 = vadd.f32 %v956, %v1107
      %v1109 = vpop.f32.mrf.mxu0
      %1110 = vmatprep.mubr.bf16.mxu0 0
      %1111 = vmatmul.mubr.bf16.gmra.mxu0 %v932
      %v1112 = vpop.f32.mrf.mxu0
      %v1113 = vadd.f32 %v956, %v1112
      %v1114 = vpop.f32.mrf.mxu0
      %v1115 = vpop.f32.mrf.mxu0
      %v1116 = vadd.f32 %v956, %v1115
      %v1117 = vpop.f32.mrf.mxu0
      %1118 = vmatprep.mubr.bf16.mxu0 0
      %1119 = vmatmul.mubr.bf16.gmra.mxu0 %v933
      %v1120 = vpop.f32.mrf.mxu0
      %v1121 = vadd.f32 %v956, %v1120
      %v1122 = vpop.f32.mrf.mxu0
      %v1123 = vpop.f32.mrf.mxu0
      %v1124 = vadd.f32 %v956, %v1123
      %v1125 = vpop.f32.mrf.mxu0
      %1126 = vmatprep.mubr.bf16.mxu0 0
      %1127 = vmatmul.mubr.bf16.gmra.mxu0 %v934
      %v1128 = vpop.f32.mrf.mxu0
      %v1129 = vadd.f32 %v956, %v1128
      %v1130 = vpop.f32.mrf.mxu0
      %v1131 = vpop.f32.mrf.mxu0
      %v1132 = vadd.f32 %v956, %v1131
      %v1133 = vpop.f32.mrf.mxu0
      %1134 = vdwg.mxu0
      %v1135 = vmax.f32 %v1041, 0.0
      %v1136 = vmax.f32 %v1044, 0.0
      %v1137 = vmax.f32 %v1049, 0.0
      %v1138 = vmax.f32 %v1052, 0.0
      %v1139 = vmax.f32 %v1057, 0.0
      %v1140 = vmax.f32 %v1060, 0.0
      %v1141 = vmax.f32 %v1065, 0.0
      %v1142 = vmax.f32 %v1068, 0.0
      %v1143 = vmax.f32 %v1073, 0.0
      %v1144 = vmax.f32 %v1076, 0.0
      %v1145 = vmax.f32 %v1081, 0.0
      %v1146 = vmax.f32 %v1084, 0.0
      %v1147 = vmax.f32 %v1089, 0.0
      %v1148 = vmax.f32 %v1092, 0.0
      %v1149 = vmax.f32 %v1097, 0.0
      %v1150 = vmax.f32 %v1100, 0.0
      %v1151 = vmax.f32 %v1105, 0.0
      %v1152 = vmax.f32 %v1108, 0.0
      %v1153 = vmax.f32 %v1113, 0.0
      %v1154 = vmax.f32 %v1116, 0.0
      %v1155 = vmax.f32 %v1121, 0.0
      %v1156 = vmax.f32 %v1124, 0.0
      %v1157 = vmax.f32 %v1129, 0.0
      %v1158 = vmax.f32 %v1132, 0.0
      %v1159 = vpack.c.bf16 %v1136, %v1135
      %v1160 = vpack.c.bf16 %v1138, %v1137
      %v1161 = vpack.c.bf16 %v1140, %v1139
      %v1162 = vpack.c.bf16 %v1142, %v1141
      %v1163 = vpack.c.bf16 %v1144, %v1143
      %v1164 = vpack.c.bf16 %v1146, %v1145
      %v1165 = vpack.c.bf16 %v1148, %v1147
      %v1166 = vpack.c.bf16 %v1150, %v1149
      %v1167 = vpack.c.bf16 %v1152, %v1151
      %v1168 = vpack.c.bf16 %v1154, %v1153
      %v1169 = vpack.c.bf16 %v1156, %v1155
      %v1170 = vpack.c.bf16 %v1158, %v1157
      %v1183 = vunpack.c.l.b16 %v1159
      %v1184 = vunpack.c.h.b16 %v1159
      %v1185 = vunpack.c.l.b16 %v1160
      %v1186 = vunpack.c.h.b16 %v1160
      %v1187 = vunpack.c.l.b16 %v1161
      %v1188 = vunpack.c.h.b16 %v1161
      %v1189 = vunpack.c.l.b16 %v1162
      %v1190 = vunpack.c.h.b16 %v1162
      %v1191 = vunpack.c.l.b16 %v1163
      %v1192 = vunpack.c.h.b16 %v1163
      %v1193 = vunpack.c.l.b16 %v1164
      %v1194 = vunpack.c.h.b16 %v1164
      %v1195 = vunpack.c.l.b16 %v1165
      %v1196 = vunpack.c.h.b16 %v1165
      %v1197 = vunpack.c.l.b16 %v1166
      %v1198 = vunpack.c.h.b16 %v1166
      %v1199 = vunpack.c.l.b16 %v1167
      %v1200 = vunpack.c.h.b16 %v1167
      %v1201 = vunpack.c.l.b16 %v1168
      %v1202 = vunpack.c.h.b16 %v1168
      %v1203 = vunpack.c.l.b16 %v1169
      %v1204 = vunpack.c.h.b16 %v1169
      %v1205 = vunpack.c.l.b16 %v1170
      %v1206 = vunpack.c.h.b16 %v1170
      %v1207 = vpack.c.b16 %v1183, %v1183
      %v1208 = vpack.c.b16 %v1184, %v1184
      %v1209 = vpack.c.b16 %v1185, %v1185
      %v1210 = vpack.c.b16 %v1186, %v1186
      %v1211 = vpack.c.b16 %v1187, %v1187
      %v1212 = vpack.c.b16 %v1188, %v1188
      %v1213 = vpack.c.b16 %v1189, %v1189
      %v1214 = vpack.c.b16 %v1190, %v1190
      %v1215 = vpack.c.b16 %v1191, %v1191
      %v1216 = vpack.c.b16 %v1192, %v1192
      %v1217 = vpack.c.b16 %v1193, %v1193
      %v1218 = vpack.c.b16 %v1194, %v1194
      %v1219 = vpack.c.b16 %v1195, %v1195
      %v1220 = vpack.c.b16 %v1196, %v1196
      %v1221 = vpack.c.b16 %v1197, %v1197
      %v1222 = vpack.c.b16 %v1198, %v1198
      %v1223 = vpack.c.b16 %v1199, %v1199
      %v1224 = vpack.c.b16 %v1200, %v1200
      %v1225 = vpack.c.b16 %v1201, %v1201
      %v1226 = vpack.c.b16 %v1202, %v1202
      %v1227 = vpack.c.b16 %v1203, %v1203
      %v1228 = vpack.c.b16 %v1204, %v1204
      %v1229 = vpack.c.b16 %v1205, %v1205
      %v1230 = vpack.c.b16 %v1206, %v1206
      %1255 = vst [vmem:[%s230] sm:$0xf] %v1207
      %1256 = vst [vmem:[%s230 + $0x4] sm:$0xf] %v1208
      %1257 = vst [vmem:[%s230 + $0x8] sm:$0xf] %v1209
      %1258 = vst [vmem:[%s230 + $0xc] sm:$0xf] %v1210
      %1259 = vst [vmem:[%s230 + $0x10] sm:$0xf] %v1211
      %1260 = vst [vmem:[%s230 + $0x14] sm:$0xf] %v1212
      %1261 = vst [vmem:[%s230 + $0x18] sm:$0xf] %v1213
      %1262 = vst [vmem:[%s230 + $0x1c] sm:$0xf] %v1214
      %1263 = vst [vmem:[%s230 + $0x20] sm:$0xf] %v1215
      %1264 = vst [vmem:[%s230 + $0x24] sm:$0xf] %v1216
      %1265 = vst [vmem:[%s230 + $0x28] sm:$0xf] %v1217
      %1266 = vst [vmem:[%s230 + $0x2c] sm:$0xf] %v1218
      %1267 = vst [vmem:[%s230 + $0x30] sm:$0xf] %v1219
      %1268 = vst [vmem:[%s230 + $0x34] sm:$0xf] %v1220
      %1269 = vst [vmem:[%s230 + $0x38] sm:$0xf] %v1221
      %1270 = vst [vmem:[%s230 + $0x3c] sm:$0xf] %v1222
      %1271 = vst [vmem:[%s230 + $0x40] sm:$0xf] %v1223
      %1272 = vst [vmem:[%s230 + $0x44] sm:$0xf] %v1224
      %1273 = vst [vmem:[%s230 + $0x48] sm:$0xf] %v1225
      %1274 = vst [vmem:[%s230 + $0x4c] sm:$0xf] %v1226
      %1275 = vst [vmem:[%s230 + $0x50] sm:$0xf] %v1227
      %1276 = vst [vmem:[%s230 + $0x54] sm:$0xf] %v1228
      %1277 = vst [vmem:[%s230 + $0x58] sm:$0xf] %v1229
      %1278 = vst [vmem:[%s230 + $0x5c] sm:$0xf] %v1230
      %s1279 = smul.u32 24, %s19
      %p1280 = scmp.lt.s32.totalorder %s1279, 47
      %s1281 = scalar_select %p1280, %s1279, 47
      %s1282 = smul.addr %s1281, 4
      %s1283 = scalar_lea.vmem %s4, %s1282
      // Predicated region
      $region37: #{fedgsl_gcn_forward.2} parent=35 // pred_check
        %p1284 = pneg %p136
      $region38: #{fedgsl_gcn_forward.2} parent=35 // pred_check_branch
        %1286 = sbr.rel (%p1284) target = $region40
      $region39: #{fedgsl_gcn_forward.2} parent=35 // pred_region
        %s1287 = smul.u32 24, %s19
      $region40: #{fedgsl_gcn_forward.2} parent=35 // pred_fallthru
        _
    $region36: #{fedgsl_gcn_forward.2} parent=5 // pred_fallthru
      _
    %p1288 = scmp.le.s32.totalorder 2, %s10
    // Predicated region
    $region41: #{fedgsl_gcn_forward.2} parent=5 // pred_check
      %p1289 = pneg %p1288
    $region42: #{fedgsl_gcn_forward.2} parent=5 // pred_check_branch
      %1291 = sbr.rel (%p1289) target = $region44
    $region43: #{fedgsl_gcn_forward.2} parent=5 // pred_region
      %s1292 = ssub.s32 %s10, 2
      // Predicated region
      $region45: #{fedgsl_gcn_forward.2} parent=43 // pred_check
        %p1293 = pneg %p142
      $region46: #{fedgsl_gcn_forward.2} parent=43 // pred_check_branch
        %1295 = sbr.rel (%p1293) target = $region48
      $region47: #{fedgsl_gcn_forward.2} parent=43 // pred_region
        %s1296 = smul.u32 24, %s21
        %p1297 = scmp.lt.s32.totalorder %s1296, 47
        %s1298 = scalar_select %p1297, %s1296, 47
        %s1299 = smul.addr %s1298, 4
        %s1300 = scalar_lea.vmem %s4, %s1299
      $region48: #{fedgsl_gcn_forward.2} parent=43 // pred_fallthru
        _
    $region44: #{fedgsl_gcn_forward.2} parent=5 // pred_fallthru
      _
  $region6: #{fedgsl_gcn_forward.2} parent=0 // loop_footer
    %s14 = sadd.s32 1, %s10
  $region7: #{fedgsl_gcn_forward.2} parent=0 // loop_footer_branch
    %9 = sbr.rel target = $region3
  $region8: #{fedgsl_gcn_forward.2} parent=0 // loop_exit
    _

// kernel: fedgsl_gcn_forward.3
$region0: #{fedgsl_gcn_forward.3}
  #allocation0 [shape = 'u32[]', space=smem, size = 0x4, offset = 0x4, fixed_abs, tag = 'smem constant byte address 0x4 - core index']
  #allocation1 [shape = 'u32[144,128]{1,0:T(1,128)}', space=vmem, size = 0x12000, scoped, tag = 'internal scratch']
  #allocation2 [shape = 'f32[192,128]{1,0:T(8,128)}', space=vmem, size = 0x18000, scoped, tag = 'scratch operand']
  %s0 = inlined_call_operand.vmem [shape: bf16[384,384], index: 0, kind: input, shape index: {}]
  %s1 = inlined_call_operand.vmem [shape: bf16[384,128], index: 1, kind: input, shape index: {}]
  %s2 = inlined_call_operand.vmem [shape: bf16[384,128], index: 2, kind: input, shape index: {}]
  %s3 = inlined_call_operand.vmem [shape: bf16[128,128], index: 3, kind: input, shape index: {}]
  %s4 = inlined_call_operand.vmem [shape: f32[1,128], index: 4, kind: input, shape index: {}]
  %s5 = inlined_call_operand.vmem [shape: bf16[128,128], index: 5, kind: input, shape index: {}]
  %s6 = inlined_call_operand.vmem [shape: bf16[128,128], index: 6, kind: input, shape index: {}]
  %s7 = inlined_call_operand.vmem [shape: f32[1,128], index: 7, kind: input, shape index: {}]
  %s8 = inlined_call_operand.vmem [shape: f32[384,128], index: 8, kind: output, shape index: {}]
  %s9 = sld [smem:[#allocation0]]
  $region65: #{fedgsl_gcn_forward.3} parent=0
    _
  %s11 = ssub.s32 1, %s9
  %s12 = scalar_select 0, %s11, %s9
  loop: start=0, step=1, limit=4
  $region2: #{fedgsl_gcn_forward.3} parent=0 // loop_pre_header
    _
  $region3: #{fedgsl_gcn_forward.3} parent=0 // loop_header
    %s14 = sphi 0, %s18
    %p15 = scmp.ge.s32.totalorder %s14, 4
    %s21 = sphi 0, %s33
    %s22 = sphi 0, %s29
    %s23 = sphi 0, %s21
    %s24 = sphi 0, %s22
    %s25 = sphi 0, %s23
    %s26 = sphi 0, %s24
    %s38 = sphi 0, %s40
    %s41 = sphi 0, %s38
    %s42 = sphi 0, %s41
    %s58 = sphi 0, %s42
    %s62 = sphi 0, %s62
    %s64 = sphi 0, %s62
    %s65 = sphi 0, %s64
    %s79 = sphi 0, %s65
    %s85 = sphi 0, %s87
    %s88 = sphi 0, %s85
    %s89 = sphi 0, %s88
    %s105 = sphi 0, %s89
    %s109 = sphi 0, %s109
    %s111 = sphi 0, %s109
    %s112 = sphi 0, %s111
    %s126 = sphi 0, %s112
    %s130 = sphi 0, %s130
    %s132 = sphi 0, %s130
    %s133 = sphi 0, %s132
    %s147 = sphi 0, %s133
    %s151 = sphi 0, %s151
    %s153 = sphi 0, %s151
    %s154 = sphi 0, %s153
    %s168 = sphi 0, %s154
    %s172 = sphi 0, %s172
    %s174 = sphi 0, %s172
    %s175 = sphi 0, %s174
    %s189 = sphi 0, %s175
    %s193 = sphi 0, %s193
    %s195 = sphi 0, %s193
    %s196 = sphi 0, %s195
    %s210 = sphi 0, %s196
    %s216 = sphi 0, %s218
    %s219 = sphi 0, %s216
    %s220 = sphi 0, %s219
    %s236 = sphi 0, %s220
  $region4: #{fedgsl_gcn_forward.3} parent=0 // loop_header_branch
    %17 = sbr.rel (%p15) target = $region8
  $region5: #{fedgsl_gcn_forward.3} parent=0 // loop_body
    %s19 = ssub.s32 %s14, 1
    %s20 = ssub.s32 %s14, 2
    %s27 = sadd.s32 1, %s22
    %p28 = scmp.ge.s32.totalorder %s27, 1
    %s29 = scalar_select %p28, 0, %s27
    %s30 = sadd.s32 1, %s21
    %s31 = scalar_select %p28, %s30, %s21
    %p32 = scmp.ge.s32.totalorder %s31, 2
    %s33 = scalar_select %p32, 0, %s31
    %s34 = ssub.s32 %s21, %s33
    %s35 = ssub.s32 %s22, %s29
    %s36 = sor.u32 %s34, %s35
    %p37 = scmp.eq.s32.totalorder %s36, 0
    %s39 = sadd.s32 %s38, 1
    %s40 = scalar_select %p37, %s38, %s39
    %p43 = pneg %p37
    %p44 = scmp.eq.s32.totalorder %s14, 1
    %p45 = por %p43, %p44
    %p46 = scmp.ne.s32.totalorder %s38, %s41
    %p47 = scmp.eq.s32.totalorder %s14, 0
    %p48 = por %p46, %p47
    %p49 = scmp.ne.s32.totalorder %s38, %s41
    %p50 = scmp.eq.s32.totalorder %s19, 1
    %p51 = por %p49, %p50
    %p52 = scmp.ne.s32.totalorder %s41, %s42
    %p53 = scmp.eq.s32.totalorder %s19, 0
    %p54 = por %p52, %p53
    %p55 = scmp.ne.s32.totalorder %s41, %s42
    %p56 = scmp.eq.s32.totalorder %s20, 1
    %p57 = por %p55, %p56
    %p59 = scmp.ne.s32.totalorder %s42, %s58
    %p60 = scmp.eq.s32.totalorder %s20, 0
    %p61 = por %p59, %p60
    %s63 = sadd.s32 %s62, 1
    %p66 = scmp.eq.s32.totalorder %s14, 1
    %p67 = scmp.ne.s32.totalorder %s62, %s64
    %p68 = scmp.eq.s32.totalorder %s14, 0
    %p69 = por %p67, %p68
    %p70 = scmp.ne.s32.totalorder %s62, %s64
    %p71 = scmp.eq.s32.totalorder %s19, 1
    %p72 = por %p70, %p71
    %p73 = scmp.ne.s32.totalorder %s64, %s65
    %p74 = scmp.eq.s32.totalorder %s19, 0
    %p75 = por %p73, %p74
    %p76 = scmp.ne.s32.totalorder %s64, %s65
    %p77 = scmp.eq.s32.totalorder %s20, 1
    %p78 = por %p76, %p77
    %p80 = scmp.ne.s32.totalorder %s65, %s79
    %p81 = scmp.eq.s32.totalorder %s20, 0
    %p82 = por %p80, %p81
    %s83 = ssub.s32 %s21, %s33
    %p84 = scmp.eq.s32.totalorder %s83, 0
    %s86 = sadd.s32 %s85, 1
    %s87 = scalar_select %p84, %s85, %s86
    %p90 = pneg %p84
    %p91 = scmp.eq.s32.totalorder %s14, 1
    %p92 = por %p90, %p91
    %p93 = scmp.ne.s32.totalorder %s85, %s88
    %p94 = scmp.eq.s32.totalorder %s14, 0
    %p95 = por %p93, %p94
    %p96 = scmp.ne.s32.totalorder %s85, %s88
    %p97 = scmp.eq.s32.totalorder %s19, 1
    %p98 = por %p96, %p97
    %p99 = scmp.ne.s32.totalorder %s88, %s89
    %p100 = scmp.eq.s32.totalorder %s19, 0
    %p101 = por %p99, %p100
    %p102 = scmp.ne.s32.totalorder %s88, %s89
    %p103 = scmp.eq.s32.totalorder %s20, 1
    %p104 = por %p102, %p103
    %p106 = scmp.ne.s32.totalorder %s89, %s105
    %p107 = scmp.eq.s32.totalorder %s20, 0
    %p108 = por %p106, %p107
    %s110 = sadd.s32 %s109, 1
    %p113 = scmp.eq.s32.totalorder %s14, 1
    %p114 = scmp.ne.s32.totalorder %s109, %s111
    %p115 = scmp.eq.s32.totalorder %s14, 0
    %p116 = por %p114, %p115
    %p117 = scmp.ne.s32.totalorder %s109, %s111
    %p118 = scmp.eq.s32.totalorder %s19, 1
    %p119 = por %p117, %p118
    %p120 = scmp.ne.s32.totalorder %s111, %s112
    %p121 = scmp.eq.s32.totalorder %s19, 0
    %p122 = por %p120, %p121
    %p123 = scmp.ne.s32.totalorder %s111, %s112
    %p124 = scmp.eq.s32.totalorder %s20, 1
    %p125 = por %p123, %p124
    %p127 = scmp.ne.s32.totalorder %s112, %s126
    %p128 = scmp.eq.s32.totalorder %s20, 0
    %p129 = por %p127, %p128
    %s131 = sadd.s32 %s130, 1
    %p134 = scmp.eq.s32.totalorder %s14, 1
    %p135 = scmp.ne.s32.totalorder %s130, %s132
    %p136 = scmp.eq.s32.totalorder %s14, 0
    %p137 = por %p135, %p136
    %p138 = scmp.ne.s32.totalorder %s130, %s132
    %p139 = scmp.eq.s32.totalorder %s19, 1
    %p140 = por %p138, %p139
    %p141 = scmp.ne.s32.totalorder %s132, %s133
    %p142 = scmp.eq.s32.totalorder %s19, 0
    %p143 = por %p141, %p142
    %p144 = scmp.ne.s32.totalorder %s132, %s133
    %p145 = scmp.eq.s32.totalorder %s20, 1
    %p146 = por %p144, %p145
    %p148 = scmp.ne.s32.totalorder %s133, %s147
    %p149 = scmp.eq.s32.totalorder %s20, 0
    %p150 = por %p148, %p149
    %s152 = sadd.s32 %s151, 1
    %p155 = scmp.eq.s32.totalorder %s14, 1
    %p156 = scmp.ne.s32.totalorder %s151, %s153
    %p157 = scmp.eq.s32.totalorder %s14, 0
    %p158 = por %p156, %p157
    %p159 = scmp.ne.s32.totalorder %s151, %s153
    %p160 = scmp.eq.s32.totalorder %s19, 1
    %p161 = por %p159, %p160
    %p162 = scmp.ne.s32.totalorder %s153, %s154
    %p163 = scmp.eq.s32.totalorder %s19, 0
    %p164 = por %p162, %p163
    %p165 = scmp.ne.s32.totalorder %s153, %s154
    %p166 = scmp.eq.s32.totalorder %s20, 1
    %p167 = por %p165, %p166
    %p169 = scmp.ne.s32.totalorder %s154, %s168
    %p170 = scmp.eq.s32.totalorder %s20, 0
    %p171 = por %p169, %p170
    %s173 = sadd.s32 %s172, 1
    %p176 = scmp.eq.s32.totalorder %s14, 1
    %p177 = scmp.ne.s32.totalorder %s172, %s174
    %p178 = scmp.eq.s32.totalorder %s14, 0
    %p179 = por %p177, %p178
    %p180 = scmp.ne.s32.totalorder %s172, %s174
    %p181 = scmp.eq.s32.totalorder %s19, 1
    %p182 = por %p180, %p181
    %p183 = scmp.ne.s32.totalorder %s174, %s175
    %p184 = scmp.eq.s32.totalorder %s19, 0
    %p185 = por %p183, %p184
    %p186 = scmp.ne.s32.totalorder %s174, %s175
    %p187 = scmp.eq.s32.totalorder %s20, 1
    %p188 = por %p186, %p187
    %p190 = scmp.ne.s32.totalorder %s175, %s189
    %p191 = scmp.eq.s32.totalorder %s20, 0
    %p192 = por %p190, %p191
    %s194 = sadd.s32 %s193, 1
    %p197 = scmp.eq.s32.totalorder %s14, 1
    %p198 = scmp.ne.s32.totalorder %s193, %s195
    %p199 = scmp.eq.s32.totalorder %s14, 0
    %p200 = por %p198, %p199
    %p201 = scmp.ne.s32.totalorder %s193, %s195
    %p202 = scmp.eq.s32.totalorder %s19, 1
    %p203 = por %p201, %p202
    %p204 = scmp.ne.s32.totalorder %s195, %s196
    %p205 = scmp.eq.s32.totalorder %s19, 0
    %p206 = por %p204, %p205
    %p207 = scmp.ne.s32.totalorder %s195, %s196
    %p208 = scmp.eq.s32.totalorder %s20, 1
    %p209 = por %p207, %p208
    %p211 = scmp.ne.s32.totalorder %s196, %s210
    %p212 = scmp.eq.s32.totalorder %s20, 0
    %p213 = por %p211, %p212
    %s214 = ssub.s32 %s21, %s33
    %p215 = scmp.eq.s32.totalorder %s214, 0
    %s217 = sadd.s32 %s216, 1
    %s218 = scalar_select %p215, %s216, %s217
    %p221 = pneg %p215
    %p222 = scmp.eq.s32.totalorder %s14, 1
    %p223 = por %p221, %p222
    %p224 = scmp.ne.s32.totalorder %s216, %s219
    %p225 = scmp.eq.s32.totalorder %s14, 0
    %p226 = por %p224, %p225
    %p227 = scmp.ne.s32.totalorder %s216, %s219
    %p228 = scmp.eq.s32.totalorder %s19, 1
    %p229 = por %p227, %p228
    %p230 = scmp.ne.s32.totalorder %s219, %s220
    %p231 = scmp.eq.s32.totalorder %s19, 0
    %p232 = por %p230, %p231
    %p233 = scmp.ne.s32.totalorder %s219, %s220
    %p234 = scmp.eq.s32.totalorder %s20, 1
    %p235 = por %p233, %p234
    %p237 = scmp.ne.s32.totalorder %s220, %s236
    %p238 = scmp.eq.s32.totalorder %s20, 0
    %p239 = por %p237, %p238
    %p240 = scmp.le.s32.totalorder 1, %s14
    %p241 = scmp.lt.s32.totalorder %s14, 3
    %p242 = pnand %p240, %p241
    %p243 = pneg %p242
    // Predicated region
    $region9: #{fedgsl_gcn_forward.3} parent=5 // pred_check
      _
    $region10: #{fedgsl_gcn_forward.3} parent=5 // pred_check_branch
      %245 = sbr.rel (%p242) target = $region12
    $region11: #{fedgsl_gcn_forward.3} parent=5 // pred_region
      %s246 = ssub.s32 %s14, 1
      // Predicated region
      $region13: #{fedgsl_gcn_forward.3} parent=11 // pred_check
        %p247 = pneg %p75
      $region14: #{fedgsl_gcn_forward.3} parent=11 // pred_check_branch
        %249 = sbr.rel (%p247) target = $region16
      $region15: #{fedgsl_gcn_forward.3} parent=11 // pred_region
        _
      $region16: #{fedgsl_gcn_forward.3} parent=11 // pred_fallthru
        _
      // Predicated region
      $region17: #{fedgsl_gcn_forward.3} parent=11 // pred_check
        %p250 = pneg %p122
      $region18: #{fedgsl_gcn_forward.3} parent=11 // pred_check_branch
        %252 = sbr.rel (%p250) target = $region20
      $region19: #{fedgsl_gcn_forward.3} parent=11 // pred_region
        _
      $region20: #{fedgsl_gcn_forward.3} parent=11 // pred_fallthru
        _
      // Predicated region
      $region21: #{fedgsl_gcn_forward.3} parent=11 // pred_check
        %p253 = pneg %p143
      $region22: #{fedgsl_gcn_forward.3} parent=11 // pred_check_branch
        %255 = sbr.rel (%p253) target = $region24
      $region23: #{fedgsl_gcn_forward.3} parent=11 // pred_region
        _
      $region24: #{fedgsl_gcn_forward.3} parent=11 // pred_fallthru
        _
      // Predicated region
      $region25: #{fedgsl_gcn_forward.3} parent=11 // pred_check
        %p256 = pneg %p164
      $region26: #{fedgsl_gcn_forward.3} parent=11 // pred_check_branch
        %258 = sbr.rel (%p256) target = $region28
      $region27: #{fedgsl_gcn_forward.3} parent=11 // pred_region
        _
      $region28: #{fedgsl_gcn_forward.3} parent=11 // pred_fallthru
        _
      // Predicated region
      $region29: #{fedgsl_gcn_forward.3} parent=11 // pred_check
        %p259 = pneg %p185
      $region30: #{fedgsl_gcn_forward.3} parent=11 // pred_check_branch
        %261 = sbr.rel (%p259) target = $region32
      $region31: #{fedgsl_gcn_forward.3} parent=11 // pred_region
        _
      $region32: #{fedgsl_gcn_forward.3} parent=11 // pred_fallthru
        _
      // Predicated region
      $region33: #{fedgsl_gcn_forward.3} parent=11 // pred_check
        %p262 = pneg %p206
      $region34: #{fedgsl_gcn_forward.3} parent=11 // pred_check_branch
        %264 = sbr.rel (%p262) target = $region36
      $region35: #{fedgsl_gcn_forward.3} parent=11 // pred_region
        _
      $region36: #{fedgsl_gcn_forward.3} parent=11 // pred_fallthru
        _
    $region12: #{fedgsl_gcn_forward.3} parent=5 // pred_fallthru
      _
    %p265 = scmp.lt.s32.totalorder %s14, 2
    // Predicated region
    $region37: #{fedgsl_gcn_forward.3} parent=5 // pred_check
      %p266 = pneg %p265
    $region38: #{fedgsl_gcn_forward.3} parent=5 // pred_check_branch
      %268 = sbr.rel (%p266) target = $region40
    $region39: #{fedgsl_gcn_forward.3} parent=5 // pred_region
      // Predicated region
      $region41: #{fedgsl_gcn_forward.3} parent=39 // pred_check
        %p269 = pneg %p48
      $region42: #{fedgsl_gcn_forward.3} parent=39 // pred_check_branch
        %271 = sbr.rel (%p269) target = $region44
      $region43: #{fedgsl_gcn_forward.3} parent=39 // pred_region
        %s272 = smul.u32 24, %s21
        %s273 = smul.u32 3, %s22
        %p274 = scmp.lt.s32.totalorder %s272, 47
        %s275 = scalar_select %p274, %s272, 47
        %p276 = scmp.lt.s32.totalorder %s273, 2
        %s277 = scalar_select %p276, %s273, 2
        %s278 = smul.addr %s275, 3
        %s279 = sadd.s32 %s277, %s278
        %s280 = smul.addr %s279, 4
        %s281 = scalar_lea.vmem %s0, %s280
        %s282 = smul.u32 24, %s21
        %s283 = smul.u32 3, %s22
      $region44: #{fedgsl_gcn_forward.3} parent=39 // pred_fallthru
        _
      // Predicated region
      $region45: #{fedgsl_gcn_forward.3} parent=39 // pred_check
        %p284 = pneg %p95
      $region46: #{fedgsl_gcn_forward.3} parent=39 // pred_check_branch
        %286 = sbr.rel (%p284) target = $region48
      $region47: #{fedgsl_gcn_forward.3} parent=39 // pred_region
        %s287 = smul.u32 24, %s21
        %p288 = scmp.lt.s32.totalorder %s287, 47
        %s289 = scalar_select %p288, %s287, 47
        %s290 = smul.addr %s289, 4
        %s291 = scalar_lea.vmem %s2, %s290
        %s292 = smul.u32 24, %s21
      $region48: #{fedgsl_gcn_forward.3} parent=39 // pred_fallthru
        _
    $region40: #{fedgsl_gcn_forward.3} parent=5 // pred_fallthru
      _
    %p293 = scmp.le.s32.totalorder 1, %s14
    %p294 = scmp.lt.s32.totalorder %s14, 3
    %p295 = pnand %p293, %p294
    %p296 = pneg %p295
    // Predicated region
    $region49: #{fedgsl_gcn_forward.3} parent=5 // pred_check
      _
    $region50: #{fedgsl_gcn_forward.3} parent=5 // pred_check_branch
      %298 = sbr.rel (%p295) target = $region52
    $region51: #{fedgsl_gcn_forward.3} parent=5 // pred_region
      %s299 = ssub.s32 %s14, 1
      %s300 = smul.u32 24, %s23
      %s301 = smul.u32 3, %s24
      %p302 = scmp.lt.s32.totalorder %s300, 47
      %s303 = scalar_select %p302, %s300, 47
      %p304 = scmp.lt.s32.totalorder %s301, 2
      %s305 = scalar_select %p304, %s301, 2
      %s306 = smul.addr %s303, 3
      %s307 = sadd.s32 %s305, %s306
      %s308 = smul.addr %s307, 4
      %s309 = scalar_lea.vmem %s0, %s308
      %p310 = pneg %p54
      %p311 = pneg %p51
      %p312 = pneg %p75
      %p313 = pneg %p72
      %s314 = smul.u32 24, %s23
      %p315 = scmp.lt.s32.totalorder %s314, 47
      %s316 = scalar_select %p315, %s314, 47
      %s317 = smul.addr %s316, 4
      %s318 = scalar_lea.vmem %s2, %s317
      %p319 = pneg %p101
      %p320 = pneg %p98
      %p321 = pneg %p122
      %p322 = pneg %p119
      %p323 = pneg %p143
      %p324 = pneg %p140
      %p325 = pneg %p164
      %p326 = pneg %p161
      %p327 = pneg %p185
      %p328 = pneg %p182
      %p329 = pneg %p206
      %p330 = pneg %p203
      %p331 = pneg %p232
      %p332 = pneg %p229
      %s333 = smul.u32 24, %s23
      %p334 = scmp.lt.s32.totalorder %s333, 47
      %s335 = scalar_select %p334, %s333, 47
      %s336 = smul.addr %s335, 8
      %s337 = scalar_lea.vmem %s8, %s336
      %s338 = smul.u32 24, %s23
      %s339 = smul.u32 3, %s24
      %p340 = scmp.lt.s32.totalorder %s338, 47
      %s341 = scalar_select %p340, %s338, 47
      %p342 = scmp.lt.s32.totalorder %s339, 2
      %s343 = scalar_select %p342, %s339, 2
      %s344 = smul.addr %s341, 3
      %s345 = sadd.s32 %s343, %s344
      %s346 = smul.addr %s345, 4
      %s347 = scalar_lea.vmem %s0, %s346
      %s348 = smul.u32 24, %s23
      %s349 = smul.u32 3, %s24
      %s350 = smul.u32 24, %s23
      %p351 = scmp.lt.s32.totalorder %s350, 47
      %s352 = scalar_select %p351, %s350, 47
      %s353 = smul.addr %s352, 4
      %s354 = scalar_lea.vmem %s2, %s353
      %s355 = smul.u32 24, %s23
      %s356 = smul.u32 24, %s23
      %p357 = scmp.lt.s32.totalorder %s356, 47
      %s358 = scalar_select %p357, %s356, 47
      %s359 = smul.addr %s358, 8
      %s360 = scalar_lea.vmem %s8, %s359
      %s361 = smul.u32 24, %s23
      %v363 = vld [vmem:[%s1] sm:$0xf]
      %v364 = vld [vmem:[%s1 + $0x4] sm:$0xf]
      %v365 = vld [vmem:[%s1 + $0x8] sm:$0xf]
      %v366 = vld [vmem:[%s1 + $0xc] sm:$0xf]
      %v367 = vld [vmem:[%s1 + $0x10] sm:$0xf]
      %v368 = vld [vmem:[%s1 + $0x14] sm:$0xf]
      %v369 = vld [vmem:[%s1 + $0x18] sm:$0xf]
      %v370 = vld [vmem:[%s1 + $0x1c] sm:$0xf]
      %v371 = vld [vmem:[%s1 + $0x20] sm:$0xf]
      %v372 = vld [vmem:[%s1 + $0x24] sm:$0xf]
      %v373 = vld [vmem:[%s1 + $0x28] sm:$0xf]
      %v374 = vld [vmem:[%s1 + $0x2c] sm:$0xf]
      %v375 = vld [vmem:[%s1 + $0x30] sm:$0xf]
      %v376 = vld [vmem:[%s1 + $0x34] sm:$0xf]
      %v377 = vld [vmem:[%s1 + $0x38] sm:$0xf]
      %v378 = vld [vmem:[%s1 + $0x3c] sm:$0xf]
      %v379 = vld [vmem:[%s1 + $0x40] sm:$0xf]
      %v380 = vld [vmem:[%s1 + $0x44] sm:$0xf]
      %v381 = vld [vmem:[%s1 + $0x48] sm:$0xf]
      %v382 = vld [vmem:[%s1 + $0x4c] sm:$0xf]
      %v383 = vld [vmem:[%s1 + $0x50] sm:$0xf]
      %v384 = vld [vmem:[%s1 + $0x54] sm:$0xf]
      %v385 = vld [vmem:[%s1 + $0x58] sm:$0xf]
      %v386 = vld [vmem:[%s1 + $0x5c] sm:$0xf]
      %v387 = vld [vmem:[%s1 + $0x60] sm:$0xf]
      %v388 = vld [vmem:[%s1 + $0x64] sm:$0xf]
      %v389 = vld [vmem:[%s1 + $0x68] sm:$0xf]
      %v390 = vld [vmem:[%s1 + $0x6c] sm:$0xf]
      %v391 = vld [vmem:[%s1 + $0x70] sm:$0xf]
      %v392 = vld [vmem:[%s1 + $0x74] sm:$0xf]
      %v393 = vld [vmem:[%s1 + $0x78] sm:$0xf]
      %v394 = vld [vmem:[%s1 + $0x7c] sm:$0xf]
      %v395 = vld [vmem:[%s1 + $0x80] sm:$0xf]
      %v396 = vld [vmem:[%s1 + $0x84] sm:$0xf]
      %v397 = vld [vmem:[%s1 + $0x88] sm:$0xf]
      %v398 = vld [vmem:[%s1 + $0x8c] sm:$0xf]
      %v399 = vld [vmem:[%s1 + $0x90] sm:$0xf]
      %v400 = vld [vmem:[%s1 + $0x94] sm:$0xf]
      %v401 = vld [vmem:[%s1 + $0x98] sm:$0xf]
      %v402 = vld [vmem:[%s1 + $0x9c] sm:$0xf]
      %v403 = vld [vmem:[%s1 + $0xa0] sm:$0xf]
      %v404 = vld [vmem:[%s1 + $0xa4] sm:$0xf]
      %v405 = vld [vmem:[%s1 + $0xa8] sm:$0xf]
      %v406 = vld [vmem:[%s1 + $0xac] sm:$0xf]
      %v407 = vld [vmem:[%s1 + $0xb0] sm:$0xf]
      %v408 = vld [vmem:[%s1 + $0xb4] sm:$0xf]
      %v409 = vld [vmem:[%s1 + $0xb8] sm:$0xf]
      %v410 = vld [vmem:[%s1 + $0xbc] sm:$0xf]
      %v411 = vld [vmem:[%s347] sm:$0xff]
      %v412 = vld [vmem:[%s347 + $0x8] sm:$0xf]
      %v413 = vld [vmem:[%s347 + $0xc] sm:$0xff]
      %v414 = vld [vmem:[%s347 + $0x14] sm:$0xf]
      %v415 = vld [vmem:[%s347 + $0x18] sm:$0xff]
      %v416 = vld [vmem:[%s347 + $0x20] sm:$0xf]
      %v417 = vld [vmem:[%s347 + $0x24] sm:$0xff]
      %v418 = vld [vmem:[%s347 + $0x2c] sm:$0xf]
      %v419 = vld [vmem:[%s347 + $0x30] sm:$0xff]
      %v420 = vld [vmem:[%s347 + $0x38] sm:$0xf]
      %v421 = vld [vmem:[%s347 + $0x3c] sm:$0xff]
      %v422 = vld [vmem:[%s347 + $0x44] sm:$0xf]
      %v423 = vld [vmem:[%s347 + $0x48] sm:$0xff]
      %v424 = vld [vmem:[%s347 + $0x50] sm:$0xf]
      %v425 = vld [vmem:[%s347 + $0x54] sm:$0xff]
      %v426 = vld [vmem:[%s347 + $0x5c] sm:$0xf]
      %v427 = vld [vmem:[%s347 + $0x60] sm:$0xff]
      %v428 = vld [vmem:[%s347 + $0x68] sm:$0xf]
      %v429 = vld [vmem:[%s347 + $0x6c] sm:$0xff]
      %v430 = vld [vmem:[%s347 + $0x74] sm:$0xf]
      %v431 = vld [vmem:[%s347 + $0x78] sm:$0xff]
      %v432 = vld [vmem:[%s347 + $0x80] sm:$0xf]
      %v433 = vld [vmem:[%s347 + $0x84] sm:$0xff]
      %v434 = vld [vmem:[%s347 + $0x8c] sm:$0xf]
      %v435 = vld [vmem:[%s347 + $0x90] sm:$0xff]
      %v436 = vld [vmem:[%s347 + $0x98] sm:$0xf]
      %v437 = vld [vmem:[%s347 + $0x9c] sm:$0xff]
      %v438 = vld [vmem:[%s347 + $0xa4] sm:$0xf]
      %v439 = vld [vmem:[%s347 + $0xa8] sm:$0xff]
      %v440 = vld [vmem:[%s347 + $0xb0] sm:$0xf]
      %v441 = vld [vmem:[%s347 + $0xb4] sm:$0xff]
      %v442 = vld [vmem:[%s347 + $0xbc] sm:$0xf]
      %v443 = vld [vmem:[%s347 + $0xc0] sm:$0xff]
      %v444 = vld [vmem:[%s347 + $0xc8] sm:$0xf]
      %v445 = vld [vmem:[%s347 + $0xcc] sm:$0xff]
      %v446 = vld [vmem:[%s347 + $0xd4] sm:$0xf]
      %v447 = vld [vmem:[%s347 + $0xd8] sm:$0xff]
      %v448 = vld [vmem:[%s347 + $0xe0] sm:$0xf]
      %v449 = vld [vmem:[%s347 + $0xe4] sm:$0xff]
      %v450 = vld [vmem:[%s347 + $0xec] sm:$0xf]
      %v451 = vld [vmem:[%s347 + $0xf0] sm:$0xff]
      %v452 = vld [vmem:[%s347 + $0xf8] sm:$0xf]
      %v453 = vld [vmem:[%s347 + $0xfc] sm:$0xff]
      %v454 = vld [vmem:[%s347 + $0x104] sm:$0xf]
      %v455 = vld [vmem:[%s347 + $0x108] sm:$0xff]
      %v456 = vld [vmem:[%s347 + $0x110] sm:$0xf]
      %v457 = vld [vmem:[%s347 + $0x114] sm:$0xff]
      %v458 = vld [vmem:[%s347 + $0x11c] sm:$0xf]
      %v507 = vunpack.c.l.b16 %v411
      %v508 = vunpack.c.h.b16 %v411
      %v509 = vunpack.c.l.b16 %v412
      %v510 = vunpack.c.l.b16 %v413
      %v511 = vunpack.c.h.b16 %v413
      %v512 = vunpack.c.l.b16 %v414
      %v513 = vunpack.c.l.b16 %v415
      %v514 = vunpack.c.h.b16 %v415
      %v515 = vunpack.c.l.b16 %v416
      %v516 = vunpack.c.l.b16 %v417
      %v517 = vunpack.c.h.b16 %v417
      %v518 = vunpack.c.l.b16 %v418
      %v519 = vunpack.c.l.b16 %v419
      %v520 = vunpack.c.h.b16 %v419
      %v521 = vunpack.c.l.b16 %v420
      %v522 = vunpack.c.l.b16 %v421
      %v523 = vunpack.c.h.b16 %v421
      %v524 = vunpack.c.l.b16 %v422
      %v525 = vunpack.c.l.b16 %v423
      %v526 = vunpack.c.h.b16 %v423
      %v527 = vunpack.c.l.b16 %v424
      %v528 = vunpack.c.l.b16 %v425
      %v529 = vunpack.c.h.b16 %v425
      %v530 = vunpack.c.l.b16 %v426
      %v531 = vunpack.c.l.b16 %v427
      %v532 = vunpack.c.h.b16 %v427
      %v533 = vunpack.c.l.b16 %v428
      %v534 = vunpack.c.l.b16 %v429
      %v535 = vunpack.c.h.b16 %v429
      %v536 = vunpack.c.l.b16 %v430
      %v537 = vunpack.c.l.b16 %v431
      %v538 = vunpack.c.h.b16 %v431
      %v539 = vunpack.c.l.b16 %v432
      %v540 = vunpack.c.l.b16 %v433
      %v541 = vunpack.c.h.b16 %v433
      %v542 = vunpack.c.l.b16 %v434
      %v543 = vunpack.c.l.b16 %v435
      %v544 = vunpack.c.h.b16 %v435
      %v545 = vunpack.c.l.b16 %v436
      %v546 = vunpack.c.l.b16 %v437
      %v547 = vunpack.c.h.b16 %v437
      %v548 = vunpack.c.l.b16 %v438
      %v549 = vunpack.c.l.b16 %v439
      %v550 = vunpack.c.h.b16 %v439
      %v551 = vunpack.c.l.b16 %v440
      %v552 = vunpack.c.l.b16 %v441
      %v553 = vunpack.c.h.b16 %v441
      %v554 = vunpack.c.l.b16 %v442
      %v555 = vunpack.c.l.b16 %v443
      %v556 = vunpack.c.h.b16 %v443
      %v557 = vunpack.c.l.b16 %v444
      %v558 = vunpack.c.l.b16 %v445
      %v559 = vunpack.c.h.b16 %v445
      %v560 = vunpack.c.l.b16 %v446
      %v561 = vunpack.c.l.b16 %v447
      %v562 = vunpack.c.h.b16 %v447
      %v563 = vunpack.c.l.b16 %v448
      %v564 = vunpack.c.l.b16 %v449
      %v565 = vunpack.c.h.b16 %v449
      %v566 = vunpack.c.l.b16 %v450
      %v567 = vunpack.c.l.b16 %v451
      %v568 = vunpack.c.h.b16 %v451
      %v569 = vunpack.c.l.b16 %v452
      %v570 = vunpack.c.l.b16 %v453
      %v571 = vunpack.c.h.b16 %v453
      %v572 = vunpack.c.l.b16 %v454
      %v573 = vunpack.c.l.b16 %v455
      %v574 = vunpack.c.h.b16 %v455
      %v575 = vunpack.c.l.b16 %v456
      %v576 = vunpack.c.l.b16 %v457
      %v577 = vunpack.c.h.b16 %v457
      %v578 = vunpack.c.l.b16 %v458
      %v579 = vpack.c.b16 %v510, %v507
      %v580 = vpack.c.b16 %v511, %v508
      %v581 = vpack.c.b16 %v512, %v509
      %v582 = vpack.c.b16 %v516, %v513
      %v583 = vpack.c.b16 %v517, %v514
      %v584 = vpack.c.b16 %v518, %v515
      %v585 = vpack.c.b16 %v522, %v519
      %v586 = vpack.c.b16 %v523, %v520
      %v587 = vpack.c.b16 %v524, %v521
      %v588 = vpack.c.b16 %v528, %v525
      %v589 = vpack.c.b16 %v529, %v526
      %v590 = vpack.c.b16 %v530, %v527
      %v591 = vpack.c.b16 %v534, %v531
      %v592 = vpack.c.b16 %v535, %v532
      %v593 = vpack.c.b16 %v536, %v533
      %v594 = vpack.c.b16 %v540, %v537
      %v595 = vpack.c.b16 %v541, %v538
      %v596 = vpack.c.b16 %v542, %v539
      %v597 = vpack.c.b16 %v546, %v543
      %v598 = vpack.c.b16 %v547, %v544
      %v599 = vpack.c.b16 %v548, %v545
      %v600 = vpack.c.b16 %v552, %v549
      %v601 = vpack.c.b16 %v553, %v550
      %v602 = vpack.c.b16 %v554, %v551
      %v603 = vpack.c.b16 %v558, %v555
      %v604 = vpack.c.b16 %v559, %v556
      %v605 = vpack.c.b16 %v560, %v557
      %v606 = vpack.c.b16 %v564, %v561
      %v607 = vpack.c.b16 %v565, %v562
      %v608 = vpack.c.b16 %v566, %v563
      %v609 = vpack.c.b16 %v570, %v567
      %v610 = vpack.c.b16 %v571, %v568
      %v611 = vpack.c.b16 %v572, %v569
      %v612 = vpack.c.b16 %v576, %v573
      %v613 = vpack.c.b16 %v577, %v574
      %v614 = vpack.c.b16 %v578, %v575
      %v699 = vunpack.c.l.b16 %v363
      %v700 = vunpack.c.l.b16 %v364
      %v701 = vunpack.c.l.b16 %v365
      %v702 = vunpack.c.l.b16 %v366
      %v703 = vunpack.c.l.b16 %v367
      %v704 = vunpack.c.l.b16 %v368
      %v705 = vunpack.c.l.b16 %v369
      %v706 = vunpack.c.l.b16 %v370
      %v707 = vunpack.c.l.b16 %v371
      %v708 = vunpack.c.l.b16 %v372
      %v709 = vunpack.c.l.b16 %v373
      %v710 = vunpack.c.l.b16 %v374
      %v711 = vunpack.c.l.b16 %v375
      %v712 = vunpack.c.l.b16 %v376
      %v713 = vunpack.c.l.b16 %v377
      %v714 = vunpack.c.l.b16 %v378
      %v715 = vunpack.c.l.b16 %v379
      %v716 = vunpack.c.l.b16 %v380
      %v717 = vunpack.c.l.b16 %v381
      %v718 = vunpack.c.l.b16 %v382
      %v719 = vunpack.c.l.b16 %v383
      %v720 = vunpack.c.l.b16 %v384
      %v721 = vunpack.c.l.b16 %v385
      %v722 = vunpack.c.l.b16 %v386
      %v723 = vunpack.c.l.b16 %v387
      %v724 = vunpack.c.l.b16 %v388
      %v725 = vunpack.c.l.b16 %v389
      %v726 = vunpack.c.l.b16 %v390
      %v727 = vunpack.c.l.b16 %v391
      %v728 = vunpack.c.l.b16 %v392
      %v729 = vunpack.c.l.b16 %v393
      %v730 = vunpack.c.l.b16 %v394
      %v731 = vunpack.c.l.b16 %v395
      %v732 = vunpack.c.l.b16 %v396
      %v733 = vunpack.c.l.b16 %v397
      %v734 = vunpack.c.l.b16 %v398
      %v735 = vunpack.c.l.b16 %v399
      %v736 = vunpack.c.l.b16 %v400
      %v737 = vunpack.c.l.b16 %v401
      %v738 = vunpack.c.l.b16 %v402
      %v739 = vunpack.c.l.b16 %v403
      %v740 = vunpack.c.l.b16 %v404
      %v741 = vunpack.c.l.b16 %v405
      %v742 = vunpack.c.l.b16 %v406
      %v743 = vunpack.c.l.b16 %v407
      %v744 = vunpack.c.l.b16 %v408
      %v745 = vunpack.c.l.b16 %v409
      %v746 = vunpack.c.l.b16 %v410
      %v747 = vpack.c.b16 %v700, %v699
      %v748 = vpack.c.b16 %v702, %v701
      %v749 = vpack.c.b16 %v704, %v703
      %v750 = vpack.c.b16 %v706, %v705
      %v751 = vpack.c.b16 %v708, %v707
      %v752 = vpack.c.b16 %v710, %v709
      %v753 = vpack.c.b16 %v712, %v711
      %v754 = vpack.c.b16 %v714, %v713
      %v755 = vpack.c.b16 %v716, %v715
      %v756 = vpack.c.b16 %v718, %v717
      %v757 = vpack.c.b16 %v720, %v719
      %v758 = vpack.c.b16 %v722, %v721
      %v759 = vpack.c.b16 %v724, %v723
      %v760 = vpack.c.b16 %v726, %v725
      %v761 = vpack.c.b16 %v728, %v727
      %v762 = vpack.c.b16 %v730, %v729
      %v763 = vpack.c.b16 %v732, %v731
      %v764 = vpack.c.b16 %v734, %v733
      %v765 = vpack.c.b16 %v736, %v735
      %v766 = vpack.c.b16 %v738, %v737
      %v767 = vpack.c.b16 %v740, %v739
      %v768 = vpack.c.b16 %v742, %v741
      %v769 = vpack.c.b16 %v744, %v743
      %v770 = vpack.c.b16 %v746, %v745
      %795 = vmatprep.subr.bf16.mxu0 0
      %796 = vmatpush1.bf16.msra.mxu0 %v754
      %797 = vmatprep.subr.bf16.mxu0 0
      %798 = vmatpush1.bf16.msra.mxu0 %v753
      %799 = vmatprep.subr.bf16.mxu0 0
      %800 = vmatpush1.bf16.msra.mxu0 %v752
      %801 = vmatprep.subr.bf16.mxu0 0
      %802 = vmatpush1.bf16.msra.mxu0 %v751
      %803 = vmatprep.subr.bf16.mxu0 0
      %804 = vmatpush1.bf16.msra.mxu0 %v750
      %805 = vmatprep.subr.bf16.mxu0 0
      %806 = vmatpush1.bf16.msra.mxu0 %v749
      %807 = vmatprep.subr.bf16.mxu0 0
      %808 = vmatpush1.bf16.msra.mxu0 %v748
      %809 = vmatprep.subr.bf16.mxu0 0
      %810 = vmatpush1.bf16.msra.mxu0 %v747
      %811 = vmatprep.subr.bf16.mxu0 0
      %812 = vmatpush2.bf16.msra.mxu0 %v762
      %813 = vmatprep.subr.bf16.mxu0 0
      %814 = vmatpush2.bf16.msra.mxu0 %v761
      %815 = vmatprep.subr.bf16.mxu0 0
      %816 = vmatpush2.bf16.msra.mxu0 %v760
      %817 = vmatprep.subr.bf16.mxu0 0
      %818 = vmatpush2.bf16.msra.mxu0 %v759
      %819 = vmatprep.subr.bf16.mxu0 0
      %820 = vmatpush2.bf16.msra.mxu0 %v758
      %821 = vmatprep.subr.bf16.mxu0 0
      %822 = vmatpush2.bf16.msra.mxu0 %v757
      %823 = vmatprep.subr.bf16.mxu0 0
      %824 = vmatpush2.bf16.msra.mxu0 %v756
      %825 = vmatprep.subr.bf16.mxu0 0
      %826 = vmatpush2.bf16.msra.mxu0 %v755
      %827 = vmatprep.mubr.bf16.mxu0 %v580
      %828 = vmatmul.mubr.bf16.gmra.mxu0 %v579
      %v829 = vpop.f32.mrf.mxu0
      %v830 = vadd.f32 0.0, %v829
      %v831 = vpop.f32.mrf.mxu0
      %v832 = vpop.f32.mrf.mxu0
      %v833 = vadd.f32 0.0, %v832
      %v834 = vpop.f32.mrf.mxu0
      %835 = vmatprep.mubr.bf16.mxu0 %v583
      %836 = vmatmul.mubr.bf16.gmra.mxu0 %v582
      %v837 = vpop.f32.mrf.mxu0
      %v838 = vadd.f32 0.0, %v837
      %v839 = vpop.f32.mrf.mxu0
      %v840 = vpop.f32.mrf.mxu0
      %v841 = vadd.f32 0.0, %v840
      %v842 = vpop.f32.mrf.mxu0
      %843 = vmatprep.mubr.bf16.mxu0 %v586
      %844 = vmatmul.mubr.bf16.gmra.mxu0 %v585
      %v845 = vpop.f32.mrf.mxu0
      %v846 = vadd.f32 0.0, %v845
      %v847 = vpop.f32.mrf.mxu0
      %v848 = vpop.f32.mrf.mxu0
      %v849 = vadd.f32 0.0, %v848
      %v850 = vpop.f32.mrf.mxu0
      %851 = vmatprep.mubr.bf16.mxu0 %v589
      %852 = vmatmul.mubr.bf16.gmra.mxu0 %v588
      %v853 = vpop.f32.mrf.mxu0
      %v854 = vadd.f32 0.0, %v853
      %v855 = vpop.f32.mrf.mxu0
      %v856 = vpop.f32.mrf.mxu0
      %v857 = vadd.f32 0.0, %v856
      %v858 = vpop.f32.mrf.mxu0
      %859 = vmatprep.mubr.bf16.mxu0 %v592
      %860 = vmatmul.mubr.bf16.gmra.mxu0 %v591
      %v861 = vpop.f32.mrf.mxu0
      %v862 = vadd.f32 0.0, %v861
      %v863 = vpop.f32.mrf.mxu0
      %v864 = vpop.f32.mrf.mxu0
      %v865 = vadd.f32 0.0, %v864
      %v866 = vpop.f32.mrf.mxu0
      %867 = vmatprep.mubr.bf16.mxu0 %v595
      %868 = vmatmul.mubr.bf16.gmra.mxu0 %v594
      %v869 = vpop.f32.mrf.mxu0
      %v870 = vadd.f32 0.0, %v869
      %v871 = vpop.f32.mrf.mxu0
      %v872 = vpop.f32.mrf.mxu0
      %v873 = vadd.f32 0.0, %v872
      %v874 = vpop.f32.mrf.mxu0
      %875 = vmatprep.mubr.bf16.mxu0 %v598
      %876 = vmatmul.mubr.bf16.gmra.mxu0 %v597
      %v877 = vpop.f32.mrf.mxu0
      %v878 = vadd.f32 0.0, %v877
      %v879 = vpop.f32.mrf.mxu0
      %v880 = vpop.f32.mrf.mxu0
      %v881 = vadd.f32 0.0, %v880
      %v882 = vpop.f32.mrf.mxu0
      %883 = vmatprep.mubr.bf16.mxu0 %v601
      %884 = vmatmul.mubr.bf16.gmra.mxu0 %v600
      %v885 = vpop.f32.mrf.mxu0
      %v886 = vadd.f32 0.0, %v885
      %v887 = vpop.f32.mrf.mxu0
      %v888 = vpop.f32.mrf.mxu0
      %v889 = vadd.f32 0.0, %v888
      %v890 = vpop.f32.mrf.mxu0
      %891 = vmatprep.mubr.bf16.mxu0 %v604
      %892 = vmatmul.mubr.bf16.gmra.mxu0 %v603
      %v893 = vpop.f32.mrf.mxu0
      %v894 = vadd.f32 0.0, %v893
      %v895 = vpop.f32.mrf.mxu0
      %v896 = vpop.f32.mrf.mxu0
      %v897 = vadd.f32 0.0, %v896
      %v898 = vpop.f32.mrf.mxu0
      %899 = vmatprep.mubr.bf16.mxu0 %v607
      %900 = vmatmul.mubr.bf16.gmra.mxu0 %v606
      %v901 = vpop.f32.mrf.mxu0
      %v902 = vadd.f32 0.0, %v901
      %v903 = vpop.f32.mrf.mxu0
      %v904 = vpop.f32.mrf.mxu0
      %v905 = vadd.f32 0.0, %v904
      %v906 = vpop.f32.mrf.mxu0
      %907 = vmatprep.mubr.bf16.mxu0 %v610
      %908 = vmatmul.mubr.bf16.gmra.mxu0 %v609
      %v909 = vpop.f32.mrf.mxu0
      %v910 = vadd.f32 0.0, %v909
      %v911 = vpop.f32.mrf.mxu0
      %v912 = vpop.f32.mrf.mxu0
      %v913 = vadd.f32 0.0, %v912
      %v914 = vpop.f32.mrf.mxu0
      %915 = vmatprep.mubr.bf16.mxu0 %v613
      %916 = vmatmul.mubr.bf16.gmra.mxu0 %v612
      %v917 = vpop.f32.mrf.mxu0
      %v918 = vadd.f32 0.0, %v917
      %v919 = vpop.f32.mrf.mxu0
      %v920 = vpop.f32.mrf.mxu0
      %v921 = vadd.f32 0.0, %v920
      %v922 = vpop.f32.mrf.mxu0
      %923 = vdwg.mxu0
      %924 = vmatprep.subr.bf16.mxu0 0
      %925 = vmatpush1.bf16.msra.mxu0 %v770
      %926 = vmatprep.subr.bf16.mxu0 0
      %927 = vmatpush1.bf16.msra.mxu0 %v769
      %928 = vmatprep.subr.bf16.mxu0 0
      %929 = vmatpush1.bf16.msra.mxu0 %v768
      %930 = vmatprep.subr.bf16.mxu0 0
      %931 = vmatpush1.bf16.msra.mxu0 %v767
      %932 = vmatprep.subr.bf16.mxu0 0
      %933 = vmatpush1.bf16.msra.mxu0 %v766
      %934 = vmatprep.subr.bf16.mxu0 0
      %935 = vmatpush1.bf16.msra.mxu0 %v765
      %936 = vmatprep.subr.bf16.mxu0 0
      %937 = vmatpush1.bf16.msra.mxu0 %v764
      %938 = vmatprep.subr.bf16.mxu0 0
      %939 = vmatpush1.bf16.msra.mxu0 %v763
      %940 = vmatprep.subr.bf16.mxu0 0
      %941 = vmatpush2.bf16.msra.mxu0 0
      %942 = vmatprep.subr.bf16.mxu0 0
      %943 = vmatpush2.bf16.msra.mxu0 0
      %944 = vmatprep.subr.bf16.mxu0 0
      %945 = vmatpush2.bf16.msra.mxu0 0
      %946 = vmatprep.subr.bf16.mxu0 0
      %947 = vmatpush2.bf16.msra.mxu0 0
      %948 = vmatprep.subr.bf16.mxu0 0
      %949 = vmatpush2.bf16.msra.mxu0 0
      %950 = vmatprep.subr.bf16.mxu0 0
      %951 = vmatpush2.bf16.msra.mxu0 0
      %952 = vmatprep.subr.bf16.mxu0 0
      %953 = vmatpush2.bf16.msra.mxu0 0
      %954 = vmatprep.subr.bf16.mxu0 0
      %955 = vmatpush2.bf16.msra.mxu0 0
      %956 = vmatprep.mubr.bf16.mxu0 0
      %957 = vmatmul.mubr.bf16.gmra.mxu0 %v581
      %v958 = vpop.f32.mrf.mxu0
      %v959 = vadd.f32 %v830, %v958
      %v960 = vpop.f32.mrf.mxu0
      %v961 = vpop.f32.mrf.mxu0
      %v962 = vadd.f32 %v833, %v961
      %v963 = vpop.f32.mrf.mxu0
      %964 = vmatprep.mubr.bf16.mxu0 0
      %965 = vmatmul.mubr.bf16.gmra.mxu0 %v584
      %v966 = vpop.f32.mrf.mxu0
      %v967 = vadd.f32 %v838, %v966
      %v968 = vpop.f32.mrf.mxu0
      %v969 = vpop.f32.mrf.mxu0
      %v970 = vadd.f32 %v841, %v969
      %v971 = vpop.f32.mrf.mxu0
      %972 = vmatprep.mubr.bf16.mxu0 0
      %973 = vmatmul.mubr.bf16.gmra.mxu0 %v587
      %v974 = vpop.f32.mrf.mxu0
      %v975 = vadd.f32 %v846, %v974
      %v976 = vpop.f32.mrf.mxu0
      %v977 = vpop.f32.mrf.mxu0
      %v978 = vadd.f32 %v849, %v977
      %v979 = vpop.f32.mrf.mxu0
      %980 = vmatprep.mubr.bf16.mxu0 0
      %981 = vmatmul.mubr.bf16.gmra.mxu0 %v590
      %v982 = vpop.f32.mrf.mxu0
      %v983 = vadd.f32 %v854, %v982
      %v984 = vpop.f32.mrf.mxu0
      %v985 = vpop.f32.mrf.mxu0
      %v986 = vadd.f32 %v857, %v985
      %v987 = vpop.f32.mrf.mxu0
      %988 = vmatprep.mubr.bf16.mxu0 0
      %989 = vmatmul.mubr.bf16.gmra.mxu0 %v593
      %v990 = vpop.f32.mrf.mxu0
      %v991 = vadd.f32 %v862, %v990
      %v992 = vpop.f32.mrf.mxu0
      %v993 = vpop.f32.mrf.mxu0
      %v994 = vadd.f32 %v865, %v993
      %v995 = vpop.f32.mrf.mxu0
      %996 = vmatprep.mubr.bf16.mxu0 0
      %997 = vmatmul.mubr.bf16.gmra.mxu0 %v596
      %v998 = vpop.f32.mrf.mxu0
      %v999 = vadd.f32 %v870, %v998
      %v1000 = vpop.f32.mrf.mxu0
      %v1001 = vpop.f32.mrf.mxu0
      %v1002 = vadd.f32 %v873, %v1001
      %v1003 = vpop.f32.mrf.mxu0
      %1004 = vmatprep.mubr.bf16.mxu0 0
      %1005 = vmatmul.mubr.bf16.gmra.mxu0 %v599
      %v1006 = vpop.f32.mrf.mxu0
      %v1007 = vadd.f32 %v878, %v1006
      %v1008 = vpop.f32.mrf.mxu0
      %v1009 = vpop.f32.mrf.mxu0
      %v1010 = vadd.f32 %v881, %v1009
      %v1011 = vpop.f32.mrf.mxu0
      %1012 = vmatprep.mubr.bf16.mxu0 0
      %1013 = vmatmul.mubr.bf16.gmra.mxu0 %v602
      %v1014 = vpop.f32.mrf.mxu0
      %v1015 = vadd.f32 %v886, %v1014
      %v1016 = vpop.f32.mrf.mxu0
      %v1017 = vpop.f32.mrf.mxu0
      %v1018 = vadd.f32 %v889, %v1017
      %v1019 = vpop.f32.mrf.mxu0
      %1020 = vmatprep.mubr.bf16.mxu0 0
      %1021 = vmatmul.mubr.bf16.gmra.mxu0 %v605
      %v1022 = vpop.f32.mrf.mxu0
      %v1023 = vadd.f32 %v894, %v1022
      %v1024 = vpop.f32.mrf.mxu0
      %v1025 = vpop.f32.mrf.mxu0
      %v1026 = vadd.f32 %v897, %v1025
      %v1027 = vpop.f32.mrf.mxu0
      %1028 = vmatprep.mubr.bf16.mxu0 0
      %1029 = vmatmul.mubr.bf16.gmra.mxu0 %v608
      %v1030 = vpop.f32.mrf.mxu0
      %v1031 = vadd.f32 %v902, %v1030
      %v1032 = vpop.f32.mrf.mxu0
      %v1033 = vpop.f32.mrf.mxu0
      %v1034 = vadd.f32 %v905, %v1033
      %v1035 = vpop.f32.mrf.mxu0
      %1036 = vmatprep.mubr.bf16.mxu0 0
      %1037 = vmatmul.mubr.bf16.gmra.mxu0 %v611
      %v1038 = vpop.f32.mrf.mxu0
      %v1039 = vadd.f32 %v910, %v1038
      %v1040 = vpop.f32.mrf.mxu0
      %v1041 = vpop.f32.mrf.mxu0
      %v1042 = vadd.f32 %v913, %v1041
      %v1043 = vpop.f32.mrf.mxu0
      %1044 = vmatprep.mubr.bf16.mxu0 0
      %1045 = vmatmul.mubr.bf16.gmra.mxu0 %v614
      %v1046 = vpop.f32.mrf.mxu0
      %v1047 = vadd.f32 %v918, %v1046
      %v1048 = vpop.f32.mrf.mxu0
      %v1049 = vpop.f32.mrf.mxu0
      %v1050 = vadd.f32 %v921, %v1049
      %v1051 = vpop.f32.mrf.mxu0
      %1052 = vdwg.mxu0
      %v1053 = vpack.c.bf16 %v962, %v959
      %v1054 = vpack.c.bf16 %v970, %v967
      %v1055 = vpack.c.bf16 %v978, %v975
      %v1056 = vpack.c.bf16 %v986, %v983
      %v1057 = vpack.c.bf16 %v994, %v991
      %v1058 = vpack.c.bf16 %v1002, %v999
      %v1059 = vpack.c.bf16 %v1010, %v1007
      %v1060 = vpack.c.bf16 %v1018, %v1015
      %v1061 = vpack.c.bf16 %v1026, %v1023
      %v1062 = vpack.c.bf16 %v1034, %v1031
      %v1063 = vpack.c.bf16 %v1042, %v1039
      %v1064 = vpack.c.bf16 %v1050, %v1047
      %v1065 = vld [vmem:[%s3] sm:$0xf]
      %v1066 = vld [vmem:[%s3 + $0x4] sm:$0xf]
      %v1067 = vld [vmem:[%s3 + $0x8] sm:$0xf]
      %v1068 = vld [vmem:[%s3 + $0xc] sm:$0xf]
      %v1069 = vld [vmem:[%s3 + $0x10] sm:$0xf]
      %v1070 = vld [vmem:[%s3 + $0x14] sm:$0xf]
      %v1071 = vld [vmem:[%s3 + $0x18] sm:$0xf]
      %v1072 = vld [vmem:[%s3 + $0x1c] sm:$0xf]
      %v1073 = vld [vmem:[%s3 + $0x20] sm:$0xf]
      %v1074 = vld [vmem:[%s3 + $0x24] sm:$0xf]
      %v1075 = vld [vmem:[%s3 + $0x28] sm:$0xf]
      %v1076 = vld [vmem:[%s3 + $0x2c] sm:$0xf]
      %v1077 = vld [vmem:[%s3 + $0x30] sm:$0xf]
      %v1078 = vld [vmem:[%s3 + $0x34] sm:$0xf]
      %v1079 = vld [vmem:[%s3 + $0x38] sm:$0xf]
      %v1080 = vld [vmem:[%s3 + $0x3c] sm:$0xf]
      %v1081 = vld [vmem:[%s4] sm:$0x1]
      %v1083 = vlaneseq
      %v1084 = vshrl.u32 %v1083, 7
      %v1085 = vsub.s32 0, %v1084
      %v1086 = vrot.slane %v1081, %v1085
      %v1104 = vunpack.c.l.b16 %v1065
      %v1105 = vunpack.c.l.b16 %v1066
      %v1106 = vunpack.c.l.b16 %v1067
      %v1107 = vunpack.c.l.b16 %v1068
      %v1108 = vunpack.c.l.b16 %v1069
      %v1109 = vunpack.c.l.b16 %v1070
      %v1110 = vunpack.c.l.b16 %v1071
      %v1111 = vunpack.c.l.b16 %v1072
      %v1112 = vunpack.c.l.b16 %v1073
      %v1113 = vunpack.c.l.b16 %v1074
      %v1114 = vunpack.c.l.b16 %v1075
      %v1115 = vunpack.c.l.b16 %v1076
      %v1116 = vunpack.c.l.b16 %v1077
      %v1117 = vunpack.c.l.b16 %v1078
      %v1118 = vunpack.c.l.b16 %v1079
      %v1119 = vunpack.c.l.b16 %v1080
      %v1120 = vpack.c.b16 %v1105, %v1104
      %v1121 = vpack.c.b16 %v1107, %v1106
      %v1122 = vpack.c.b16 %v1109, %v1108
      %v1123 = vpack.c.b16 %v1111, %v1110
      %v1124 = vpack.c.b16 %v1113, %v1112
      %v1125 = vpack.c.b16 %v1115, %v1114
      %v1126 = vpack.c.b16 %v1117, %v1116
      %v1127 = vpack.c.b16 %v1119, %v1118
      %1136 = vmatprep.subr.bf16.mxu0 0
      %1137 = vmatpush1.bf16.msra.mxu0 %v1127
      %1138 = vmatprep.subr.bf16.mxu0 0
      %1139 = vmatpush1.bf16.msra.mxu0 %v1126
      %1140 = vmatprep.subr.bf16.mxu0 0
      %1141 = vmatpush1.bf16.msra.mxu0 %v1125
      %1142 = vmatprep.subr.bf16.mxu0 0
      %1143 = vmatpush1.bf16.msra.mxu0 %v1124
      %1144 = vmatprep.subr.bf16.mxu0 0
      %1145 = vmatpush1.bf16.msra.mxu0 %v1123
      %1146 = vmatprep.subr.bf16.mxu0 0
      %1147 = vmatpush1.bf16.msra.mxu0 %v1122
      %1148 = vmatprep.subr.bf16.mxu0 0
      %1149 = vmatpush1.bf16.msra.mxu0 %v1121
      %1150 = vmatprep.subr.bf16.mxu0 0
      %1151 = vmatpush1.bf16.msra.mxu0 %v1120
      %1152 = vmatprep.subr.bf16.mxu0 0
      %1153 = vmatpush2.bf16.msra.mxu0 0
      %1154 = vmatprep.subr.bf16.mxu0 0
      %1155 = vmatpush2.bf16.msra.mxu0 0
      %1156 = vmatprep.subr.bf16.mxu0 0
      %1157 = vmatpush2.bf16.msra.mxu0 0
      %1158 = vmatprep.subr.bf16.mxu0 0
      %1159 = vmatpush2.bf16.msra.mxu0 0
      %1160 = vmatprep.subr.bf16.mxu0 0
      %1161 = vmatpush2.bf16.msra.mxu0 0
      %1162 = vmatprep.subr.bf16.mxu0 0
      %1163 = vmatpush2.bf16.msra.mxu0 0
      %1164 = vmatprep.subr.bf16.mxu0 0
      %1165 = vmatpush2.bf16.msra.mxu0 0
      %1166 = vmatprep.subr.bf16.mxu0 0
      %1167 = vmatpush2.bf16.msra.mxu0 0
      %1168 = vmatprep.mubr.bf16.mxu0 0
      %1169 = vmatmul.mubr.bf16.gmra.mxu0 %v1053
      %v1170 = vpop.f32.mrf.mxu0
      %v1171 = vadd.f32 %v1086, %v1170
      %v1172 = vpop.f32.mrf.mxu0
      %v1173 = vpop.f32.mrf.mxu0
      %v1174 = vadd.f32 %v1086, %v1173
      %v1175 = vpop.f32.mrf.mxu0
      %1176 = vmatprep.mubr.bf16.mxu0 0
      %1177 = vmatmul.mubr.bf16.gmra.mxu0 %v1054
      %v1178 = vpop.f32.mrf.mxu0
      %v1179 = vadd.f32 %v1086, %v1178
      %v1180 = vpop.f32.mrf.mxu0
      %v1181 = vpop.f32.mrf.mxu0
      %v1182 = vadd.f32 %v1086, %v1181
      %v1183 = vpop.f32.mrf.mxu0
      %1184 = vmatprep.mubr.bf16.mxu0 0
      %1185 = vmatmul.mubr.bf16.gmra.mxu0 %v1055
      %v1186 = vpop.f32.mrf.mxu0
      %v1187 = vadd.f32 %v1086, %v1186
      %v1188 = vpop.f32.mrf.mxu0
      %v1189 = vpop.f32.mrf.mxu0
      %v1190 = vadd.f32 %v1086, %v1189
      %v1191 = vpop.f32.mrf.mxu0
      %1192 = vmatprep.mubr.bf16.mxu0 0
      %1193 = vmatmul.mubr.bf16.gmra.mxu0 %v1056
      %v1194 = vpop.f32.mrf.mxu0
      %v1195 = vadd.f32 %v1086, %v1194
      %v1196 = vpop.f32.mrf.mxu0
      %v1197 = vpop.f32.mrf.mxu0
      %v1198 = vadd.f32 %v1086, %v1197
      %v1199 = vpop.f32.mrf.mxu0
      %1200 = vmatprep.mubr.bf16.mxu0 0
      %1201 = vmatmul.mubr.bf16.gmra.mxu0 %v1057
      %v1202 = vpop.f32.mrf.mxu0
      %v1203 = vadd.f32 %v1086, %v1202
      %v1204 = vpop.f32.mrf.mxu0
      %v1205 = vpop.f32.mrf.mxu0
      %v1206 = vadd.f32 %v1086, %v1205
      %v1207 = vpop.f32.mrf.mxu0
      %1208 = vmatprep.mubr.bf16.mxu0 0
      %1209 = vmatmul.mubr.bf16.gmra.mxu0 %v1058
      %v1210 = vpop.f32.mrf.mxu0
      %v1211 = vadd.f32 %v1086, %v1210
      %v1212 = vpop.f32.mrf.mxu0
      %v1213 = vpop.f32.mrf.mxu0
      %v1214 = vadd.f32 %v1086, %v1213
      %v1215 = vpop.f32.mrf.mxu0
      %1216 = vmatprep.mubr.bf16.mxu0 0
      %1217 = vmatmul.mubr.bf16.gmra.mxu0 %v1059
      %v1218 = vpop.f32.mrf.mxu0
      %v1219 = vadd.f32 %v1086, %v1218
      %v1220 = vpop.f32.mrf.mxu0
      %v1221 = vpop.f32.mrf.mxu0
      %v1222 = vadd.f32 %v1086, %v1221
      %v1223 = vpop.f32.mrf.mxu0
      %1224 = vmatprep.mubr.bf16.mxu0 0
      %1225 = vmatmul.mubr.bf16.gmra.mxu0 %v1060
      %v1226 = vpop.f32.mrf.mxu0
      %v1227 = vadd.f32 %v1086, %v1226
      %v1228 = vpop.f32.mrf.mxu0
      %v1229 = vpop.f32.mrf.mxu0
      %v1230 = vadd.f32 %v1086, %v1229
      %v1231 = vpop.f32.mrf.mxu0
      %1232 = vmatprep.mubr.bf16.mxu0 0
      %1233 = vmatmul.mubr.bf16.gmra.mxu0 %v1061
      %v1234 = vpop.f32.mrf.mxu0
      %v1235 = vadd.f32 %v1086, %v1234
      %v1236 = vpop.f32.mrf.mxu0
      %v1237 = vpop.f32.mrf.mxu0
      %v1238 = vadd.f32 %v1086, %v1237
      %v1239 = vpop.f32.mrf.mxu0
      %1240 = vmatprep.mubr.bf16.mxu0 0
      %1241 = vmatmul.mubr.bf16.gmra.mxu0 %v1062
      %v1242 = vpop.f32.mrf.mxu0
      %v1243 = vadd.f32 %v1086, %v1242
      %v1244 = vpop.f32.mrf.mxu0
      %v1245 = vpop.f32.mrf.mxu0
      %v1246 = vadd.f32 %v1086, %v1245
      %v1247 = vpop.f32.mrf.mxu0
      %1248 = vmatprep.mubr.bf16.mxu0 0
      %1249 = vmatmul.mubr.bf16.gmra.mxu0 %v1063
      %v1250 = vpop.f32.mrf.mxu0
      %v1251 = vadd.f32 %v1086, %v1250
      %v1252 = vpop.f32.mrf.mxu0
      %v1253 = vpop.f32.mrf.mxu0
      %v1254 = vadd.f32 %v1086, %v1253
      %v1255 = vpop.f32.mrf.mxu0
      %1256 = vmatprep.mubr.bf16.mxu0 0
      %1257 = vmatmul.mubr.bf16.gmra.mxu0 %v1064
      %v1258 = vpop.f32.mrf.mxu0
      %v1259 = vadd.f32 %v1086, %v1258
      %v1260 = vpop.f32.mrf.mxu0
      %v1261 = vpop.f32.mrf.mxu0
      %v1262 = vadd.f32 %v1086, %v1261
      %v1263 = vpop.f32.mrf.mxu0
      %1264 = vdwg.mxu0
      %v1265 = vpack.c.bf16 %v1174, %v1171
      %v1266 = vpack.c.bf16 %v1182, %v1179
      %v1267 = vpack.c.bf16 %v1190, %v1187
      %v1268 = vpack.c.bf16 %v1198, %v1195
      %v1269 = vpack.c.bf16 %v1206, %v1203
      %v1270 = vpack.c.bf16 %v1214, %v1211
      %v1271 = vpack.c.bf16 %v1222, %v1219
      %v1272 = vpack.c.bf16 %v1230, %v1227
      %v1273 = vpack.c.bf16 %v1238, %v1235
      %v1274 = vpack.c.bf16 %v1246, %v1243
      %v1275 = vpack.c.bf16 %v1254, %v1251
      %v1276 = vpack.c.bf16 %v1262, %v1259
      %v1277 = vld [vmem:[%s5] sm:$0xf]
      %v1278 = vld [vmem:[%s5 + $0x4] sm:$0xf]
      %v1279 = vld [vmem:[%s5 + $0x8] sm:$0xf]
      %v1280 = vld [vmem:[%s5 + $0xc] sm:$0xf]
      %v1281 = vld [vmem:[%s5 + $0x10] sm:$0xf]
      %v1282 = vld [vmem:[%s5 + $0x14] sm:$0xf]
      %v1283 = vld [vmem:[%s5 + $0x18] sm:$0xf]
      %v1284 = vld [vmem:[%s5 + $0x1c] sm:$0xf]
      %v1285 = vld [vmem:[%s5 + $0x20] sm:$0xf]
      %v1286 = vld [vmem:[%s5 + $0x24] sm:$0xf]
      %v1287 = vld [vmem:[%s5 + $0x28] sm:$0xf]
      %v1288 = vld [vmem:[%s5 + $0x2c] sm:$0xf]
      %v1289 = vld [vmem:[%s5 + $0x30] sm:$0xf]
      %v1290 = vld [vmem:[%s5 + $0x34] sm:$0xf]
      %v1291 = vld [vmem:[%s5 + $0x38] sm:$0xf]
      %v1292 = vld [vmem:[%s5 + $0x3c] sm:$0xf]
      %v1293 = vld [vmem:[%s354] sm:$0xf]
      %v1294 = vld [vmem:[%s354 + $0x4] sm:$0xf]
      %v1295 = vld [vmem:[%s354 + $0x8] sm:$0xf]
      %v1296 = vld [vmem:[%s354 + $0xc] sm:$0xf]
      %v1297 = vld [vmem:[%s354 + $0x10] sm:$0xf]
      %v1298 = vld [vmem:[%s354 + $0x14] sm:$0xf]
      %v1299 = vld [vmem:[%s354 + $0x18] sm:$0xf]
      %v1300 = vld [vmem:[%s354 + $0x1c] sm:$0xf]
      %v1301 = vld [vmem:[%s354 + $0x20] sm:$0xf]
      %v1302 = vld [vmem:[%s354 + $0x24] sm:$0xf]
      %v1303 = vld [vmem:[%s354 + $0x28] sm:$0xf]
      %v1304 = vld [vmem:[%s354 + $0x2c] sm:$0xf]
      %v1305 = vld [vmem:[%s354 + $0x30] sm:$0xf]
      %v1306 = vld [vmem:[%s354 + $0x34] sm:$0xf]
      %v1307 = vld [vmem:[%s354 + $0x38] sm:$0xf]
      %v1308 = vld [vmem:[%s354 + $0x3c] sm:$0xf]
      %v1309 = vld [vmem:[%s354 + $0x40] sm:$0xf]
      %v1310 = vld [vmem:[%s354 + $0x44] sm:$0xf]
      %v1311 = vld [vmem:[%s354 + $0x48] sm:$0xf]
      %v1312 = vld [vmem:[%s354 + $0x4c] sm:$0xf]
      %v1313 = vld [vmem:[%s354 + $0x50] sm:$0xf]
      %v1314 = vld [vmem:[%s354 + $0x54] sm:$0xf]
      %v1315 = vld [vmem:[%s354 + $0x58] sm:$0xf]
      %v1316 = vld [vmem:[%s354 + $0x5c] sm:$0xf]
      %v1317 = vld [vmem:[%s6] sm:$0xf]
      %v1318 = vld [vmem:[%s6 + $0x4] sm:$0xf]
      %v1319 = vld [vmem:[%s6 + $0x8] sm:$0xf]
      %v1320 = vld [vmem:[%s6 + $0xc] sm:$0xf]
      %v1321 = vld [vmem:[%s6 + $0x10] sm:$0xf]
      %v1322 = vld [vmem:[%s6 + $0x14] sm:$0xf]
      %v1323 = vld [vmem:[%s6 + $0x18] sm:$0xf]
      %v1324 = vld [vmem:[%s6 + $0x1c] sm:$0xf]
      %v1325 = vld [vmem:[%s6 + $0x20] sm:$0xf]
      %v1326 = vld [vmem:[%s6 + $0x24] sm:$0xf]
      %v1327 = vld [vmem:[%s6 + $0x28] sm:$0xf]
      %v1328 = vld [vmem:[%s6 + $0x2c] sm:$0xf]
      %v1329 = vld [vmem:[%s6 + $0x30] sm:$0xf]
      %v1330 = vld [vmem:[%s6 + $0x34] sm:$0xf]
      %v1331 = vld [vmem:[%s6 + $0x38] sm:$0xf]
      %v1332 = vld [vmem:[%s6 + $0x3c] sm:$0xf]
      %v1357 = vunpack.c.l.b16 %v1293
      %v1358 = vunpack.c.l.b16 %v1294
      %v1359 = vunpack.c.l.b16 %v1295
      %v1360 = vunpack.c.l.b16 %v1296
      %v1361 = vunpack.c.l.b16 %v1297
      %v1362 = vunpack.c.l.b16 %v1298
      %v1363 = vunpack.c.l.b16 %v1299
      %v1364 = vunpack.c.l.b16 %v1300
      %v1365 = vunpack.c.l.b16 %v1301
      %v1366 = vunpack.c.l.b16 %v1302
      %v1367 = vunpack.c.l.b16 %v1303
      %v1368 = vunpack.c.l.b16 %v1304
      %v1369 = vunpack.c.l.b16 %v1305
      %v1370 = vunpack.c.l.b16 %v1306
      %v1371 = vunpack.c.l.b16 %v1307
      %v1372 = vunpack.c.l.b16 %v1308
      %v1373 = vunpack.c.l.b16 %v1309
      %v1374 = vunpack.c.l.b16 %v1310
      %v1375 = vunpack.c.l.b16 %v1311
      %v1376 = vunpack.c.l.b16 %v1312
      %v1377 = vunpack.c.l.b16 %v1313
      %v1378 = vunpack.c.l.b16 %v1314
      %v1379 = vunpack.c.l.b16 %v1315
      %v1380 = vunpack.c.l.b16 %v1316
      %v1381 = vpack.c.b16 %v1358, %v1357
      %v1382 = vpack.c.b16 %v1360, %v1359
      %v1383 = vpack.c.b16 %v1362, %v1361
      %v1384 = vpack.c.b16 %v1364, %v1363
      %v1385 = vpack.c.b16 %v1366, %v1365
      %v1386 = vpack.c.b16 %v1368, %v1367
      %v1387 = vpack.c.b16 %v1370, %v1369
      %v1388 = vpack.c.b16 %v1372, %v1371
      %v1389 = vpack.c.b16 %v1374, %v1373
      %v1390 = vpack.c.b16 %v1376, %v1375
      %v1391 = vpack.c.b16 %v1378, %v1377
      %v1392 = vpack.c.b16 %v1380, %v1379
      %v1421 = vunpack.c.l.b16 %v1317
      %v1422 = vunpack.c.l.b16 %v1318
      %v1423 = vunpack.c.l.b16 %v1319
      %v1424 = vunpack.c.l.b16 %v1320
      %v1425 = vunpack.c.l.b16 %v1321
      %v1426 = vunpack.c.l.b16 %v1322
      %v1427 = vunpack.c.l.b16 %v1323
      %v1428 = vunpack.c.l.b16 %v1324
      %v1429 = vunpack.c.l.b16 %v1325
      %v1430 = vunpack.c.l.b16 %v1326
      %v1431 = vunpack.c.l.b16 %v1327
      %v1432 = vunpack.c.l.b16 %v1328
      %v1433 = vunpack.c.l.b16 %v1329
      %v1434 = vunpack.c.l.b16 %v1330
      %v1435 = vunpack.c.l.b16 %v1331
      %v1436 = vunpack.c.l.b16 %v1332
      %v1437 = vpack.c.b16 %v1422, %v1421
      %v1438 = vpack.c.b16 %v1424, %v1423
      %v1439 = vpack.c.b16 %v1426, %v1425
      %v1440 = vpack.c.b16 %v1428, %v1427
      %v1441 = vpack.c.b16 %v1430, %v1429
      %v1442 = vpack.c.b16 %v1432, %v1431
      %v1443 = vpack.c.b16 %v1434, %v1433
      %v1444 = vpack.c.b16 %v1436, %v1435
      %1453 = vmatprep.subr.bf16.mxu0 0
      %1454 = vmatpush1.bf16.msra.mxu0 %v1444
      %1455 = vmatprep.subr.bf16.mxu0 0
      %1456 = vmatpush1.bf16.msra.mxu0 %v1443
      %1457 = vmatprep.subr.bf16.mxu0 0
      %1458 = vmatpush1.bf16.msra.mxu0 %v1442
      %1459 = vmatprep.subr.bf16.mxu0 0
      %1460 = vmatpush1.bf16.msra.mxu0 %v1441
      %1461 = vmatprep.subr.bf16.mxu0 0
      %1462 = vmatpush1.bf16.msra.mxu0 %v1440
      %1463 = vmatprep.subr.bf16.mxu0 0
      %1464 = vmatpush1.bf16.msra.mxu0 %v1439
      %1465 = vmatprep.subr.bf16.mxu0 0
      %1466 = vmatpush1.bf16.msra.mxu0 %v1438
      %1467 = vmatprep.subr.bf16.mxu0 0
      %1468 = vmatpush1.bf16.msra.mxu0 %v1437
      %1469 = vmatprep.subr.bf16.mxu0 0
      %1470 = vmatpush2.bf16.msra.mxu0 0
      %1471 = vmatprep.subr.bf16.mxu0 0
      %1472 = vmatpush2.bf16.msra.mxu0 0
      %1473 = vmatprep.subr.bf16.mxu0 0
      %1474 = vmatpush2.bf16.msra.mxu0 0
      %1475 = vmatprep.subr.bf16.mxu0 0
      %1476 = vmatpush2.bf16.msra.mxu0 0
      %1477 = vmatprep.subr.bf16.mxu0 0
      %1478 = vmatpush2.bf16.msra.mxu0 0
      %1479 = vmatprep.subr.bf16.mxu0 0
      %1480 = vmatpush2.bf16.msra.mxu0 0
      %1481 = vmatprep.subr.bf16.mxu0 0
      %1482 = vmatpush2.bf16.msra.mxu0 0
      %1483 = vmatprep.subr.bf16.mxu0 0
      %1484 = vmatpush2.bf16.msra.mxu0 0
      %1485 = vmatprep.mubr.bf16.mxu0 0
      %1486 = vmatmul.mubr.bf16.gmra.mxu0 %v1381
      %v1487 = vpop.f32.mrf.mxu0
      %v1488 = vadd.f32 0.0, %v1487
      %v1489 = vpop.f32.mrf.mxu0
      %v1490 = vpop.f32.mrf.mxu0
      %v1491 = vadd.f32 0.0, %v1490
      %v1492 = vpop.f32.mrf.mxu0
      %1493 = vmatprep.mubr.bf16.mxu0 0
      %1494 = vmatmul.mubr.bf16.gmra.mxu0 %v1382
      %v1495 = vpop.f32.mrf.mxu0
      %v1496 = vadd.f32 0.0, %v1495
      %v1497 = vpop.f32.mrf.mxu0
      %v1498 = vpop.f32.mrf.mxu0
      %v1499 = vadd.f32 0.0, %v1498
      %v1500 = vpop.f32.mrf.mxu0
      %1501 = vmatprep.mubr.bf16.mxu0 0
      %1502 = vmatmul.mubr.bf16.gmra.mxu0 %v1383
      %v1503 = vpop.f32.mrf.mxu0
      %v1504 = vadd.f32 0.0, %v1503
      %v1505 = vpop.f32.mrf.mxu0
      %v1506 = vpop.f32.mrf.mxu0
      %v1507 = vadd.f32 0.0, %v1506
      %v1508 = vpop.f32.mrf.mxu0
      %1509 = vmatprep.mubr.bf16.mxu0 0
      %1510 = vmatmul.mubr.bf16.gmra.mxu0 %v1384
      %v1511 = vpop.f32.mrf.mxu0
      %v1512 = vadd.f32 0.0, %v1511
      %v1513 = vpop.f32.mrf.mxu0
      %v1514 = vpop.f32.mrf.mxu0
      %v1515 = vadd.f32 0.0, %v1514
      %v1516 = vpop.f32.mrf.mxu0
      %1517 = vmatprep.mubr.bf16.mxu0 0
      %1518 = vmatmul.mubr.bf16.gmra.mxu0 %v1385
      %v1519 = vpop.f32.mrf.mxu0
      %v1520 = vadd.f32 0.0, %v1519
      %v1521 = vpop.f32.mrf.mxu0
      %v1522 = vpop.f32.mrf.mxu0
      %v1523 = vadd.f32 0.0, %v1522
      %v1524 = vpop.f32.mrf.mxu0
      %1525 = vmatprep.mubr.bf16.mxu0 0
      %1526 = vmatmul.mubr.bf16.gmra.mxu0 %v1386
      %v1527 = vpop.f32.mrf.mxu0
      %v1528 = vadd.f32 0.0, %v1527
      %v1529 = vpop.f32.mrf.mxu0
      %v1530 = vpop.f32.mrf.mxu0
      %v1531 = vadd.f32 0.0, %v1530
      %v1532 = vpop.f32.mrf.mxu0
      %1533 = vmatprep.mubr.bf16.mxu0 0
      %1534 = vmatmul.mubr.bf16.gmra.mxu0 %v1387
      %v1535 = vpop.f32.mrf.mxu0
      %v1536 = vadd.f32 0.0, %v1535
      %v1537 = vpop.f32.mrf.mxu0
      %v1538 = vpop.f32.mrf.mxu0
      %v1539 = vadd.f32 0.0, %v1538
      %v1540 = vpop.f32.mrf.mxu0
      %1541 = vmatprep.mubr.bf16.mxu0 0
      %1542 = vmatmul.mubr.bf16.gmra.mxu0 %v1388
      %v1543 = vpop.f32.mrf.mxu0
      %v1544 = vadd.f32 0.0, %v1543
      %v1545 = vpop.f32.mrf.mxu0
      %v1546 = vpop.f32.mrf.mxu0
      %v1547 = vadd.f32 0.0, %v1546
      %v1548 = vpop.f32.mrf.mxu0
      %1549 = vmatprep.mubr.bf16.mxu0 0
      %1550 = vmatmul.mubr.bf16.gmra.mxu0 %v1389
      %v1551 = vpop.f32.mrf.mxu0
      %v1552 = vadd.f32 0.0, %v1551
      %v1553 = vpop.f32.mrf.mxu0
      %v1554 = vpop.f32.mrf.mxu0
      %v1555 = vadd.f32 0.0, %v1554
      %v1556 = vpop.f32.mrf.mxu0
      %1557 = vmatprep.mubr.bf16.mxu0 0
      %1558 = vmatmul.mubr.bf16.gmra.mxu0 %v1390
      %v1559 = vpop.f32.mrf.mxu0
      %v1560 = vadd.f32 0.0, %v1559
      %v1561 = vpop.f32.mrf.mxu0
      %v1562 = vpop.f32.mrf.mxu0
      %v1563 = vadd.f32 0.0, %v1562
      %v1564 = vpop.f32.mrf.mxu0
      %1565 = vmatprep.mubr.bf16.mxu0 0
      %1566 = vmatmul.mubr.bf16.gmra.mxu0 %v1391
      %v1567 = vpop.f32.mrf.mxu0
      %v1568 = vadd.f32 0.0, %v1567
      %v1569 = vpop.f32.mrf.mxu0
      %v1570 = vpop.f32.mrf.mxu0
      %v1571 = vadd.f32 0.0, %v1570
      %v1572 = vpop.f32.mrf.mxu0
      %1573 = vmatprep.mubr.bf16.mxu0 0
      %1574 = vmatmul.mubr.bf16.gmra.mxu0 %v1392
      %v1575 = vpop.f32.mrf.mxu0
      %v1576 = vadd.f32 0.0, %v1575
      %v1577 = vpop.f32.mrf.mxu0
      %v1578 = vpop.f32.mrf.mxu0
      %v1579 = vadd.f32 0.0, %v1578
      %v1580 = vpop.f32.mrf.mxu0
      %1581 = vdwg.mxu0
      %v1598 = vunpack.c.l.b16 %v1277
      %v1599 = vunpack.c.l.b16 %v1278
      %v1600 = vunpack.c.l.b16 %v1279
      %v1601 = vunpack.c.l.b16 %v1280
      %v1602 = vunpack.c.l.b16 %v1281
      %v1603 = vunpack.c.l.b16 %v1282
      %v1604 = vunpack.c.l.b16 %v1283
      %v1605 = vunpack.c.l.b16 %v1284
      %v1606 = vunpack.c.l.b16 %v1285
      %v1607 = vunpack.c.l.b16 %v1286
      %v1608 = vunpack.c.l.b16 %v1287
      %v1609 = vunpack.c.l.b16 %v1288
      %v1610 = vunpack.c.l.b16 %v1289
      %v1611 = vunpack.c.l.b16 %v1290
      %v1612 = vunpack.c.l.b16 %v1291
      %v1613 = vunpack.c.l.b16 %v1292
      %v1614 = vpack.c.b16 %v1599, %v1598
      %v1615 = vpack.c.b16 %v1601, %v1600
      %v1616 = vpack.c.b16 %v1603, %v1602
      %v1617 = vpack.c.b16 %v1605, %v1604
      %v1618 = vpack.c.b16 %v1607, %v1606
      %v1619 = vpack.c.b16 %v1609, %v1608
      %v1620 = vpack.c.b16 %v1611, %v1610
      %v1621 = vpack.c.b16 %v1613, %v1612
      %1630 = vmatprep.subr.bf16.mxu0 0
      %1631 = vmatpush1.bf16.msra.mxu0 %v1621
      %1632 = vmatprep.subr.bf16.mxu0 0
      %1633 = vmatpush1.bf16.msra.mxu0 %v1620
      %1634 = vmatprep.subr.bf16.mxu0 0
      %1635 = vmatpush1.bf16.msra.mxu0 %v1619
      %1636 = vmatprep.subr.bf16.mxu0 0
      %1637 = vmatpush1.bf16.msra.mxu0 %v1618
      %1638 = vmatprep.subr.bf16.mxu0 0
      %1639 = vmatpush1.bf16.msra.mxu0 %v1617
      %1640 = vmatprep.subr.bf16.mxu0 0
      %1641 = vmatpush1.bf16.msra.mxu0 %v1616
      %1642 = vmatprep.subr.bf16.mxu0 0
      %1643 = vmatpush1.bf16.msra.mxu0 %v1615
      %1644 = vmatprep.subr.bf16.mxu0 0
      %1645 = vmatpush1.bf16.msra.mxu0 %v1614
      %1646 = vmatprep.subr.bf16.mxu0 0
      %1647 = vmatpush2.bf16.msra.mxu0 0
      %1648 = vmatprep.subr.bf16.mxu0 0
      %1649 = vmatpush2.bf16.msra.mxu0 0
      %1650 = vmatprep.subr.bf16.mxu0 0
      %1651 = vmatpush2.bf16.msra.mxu0 0
      %1652 = vmatprep.subr.bf16.mxu0 0
      %1653 = vmatpush2.bf16.msra.mxu0 0
      %1654 = vmatprep.subr.bf16.mxu0 0
      %1655 = vmatpush2.bf16.msra.mxu0 0
      %1656 = vmatprep.subr.bf16.mxu0 0
      %1657 = vmatpush2.bf16.msra.mxu0 0
      %1658 = vmatprep.subr.bf16.mxu0 0
      %1659 = vmatpush2.bf16.msra.mxu0 0
      %1660 = vmatprep.subr.bf16.mxu0 0
      %1661 = vmatpush2.bf16.msra.mxu0 0
      %1662 = vmatprep.mubr.bf16.mxu0 0
      %1663 = vmatmul.mubr.bf16.gmra.mxu0 %v1265
      %v1664 = vpop.f32.mrf.mxu0
      %v1665 = vadd.f32 %v1488, %v1664
      %v1666 = vpop.f32.mrf.mxu0
      %v1667 = vpop.f32.mrf.mxu0
      %v1668 = vadd.f32 %v1491, %v1667
      %v1669 = vpop.f32.mrf.mxu0
      %1670 = vmatprep.mubr.bf16.mxu0 0
      %1671 = vmatmul.mubr.bf16.gmra.mxu0 %v1266
      %v1672 = vpop.f32.mrf.mxu0
      %v1673 = vadd.f32 %v1496, %v1672
      %v1674 = vpop.f32.mrf.mxu0
      %v1675 = vpop.f32.mrf.mxu0
      %v1676 = vadd.f32 %v1499, %v1675
      %v1677 = vpop.f32.mrf.mxu0
      %1678 = vmatprep.mubr.bf16.mxu0 0
      %1679 = vmatmul.mubr.bf16.gmra.mxu0 %v1267
      %v1680 = vpop.f32.mrf.mxu0
      %v1681 = vadd.f32 %v1504, %v1680
      %v1682 = vpop.f32.mrf.mxu0
      %v1683 = vpop.f32.mrf.mxu0
      %v1684 = vadd.f32 %v1507, %v1683
      %v1685 = vpop.f32.mrf.mxu0
      %1686 = vmatprep.mubr.bf16.mxu0 0
      %1687 = vmatmul.mubr.bf16.gmra.mxu0 %v1268
      %v1688 = vpop.f32.mrf.mxu0
      %v1689 = vadd.f32 %v1512, %v1688
      %v1690 = vpop.f32.mrf.mxu0
      %v1691 = vpop.f32.mrf.mxu0
      %v1692 = vadd.f32 %v1515, %v1691
      %v1693 = vpop.f32.mrf.mxu0
      %1694 = vmatprep.mubr.bf16.mxu0 0
      %1695 = vmatmul.mubr.bf16.gmra.mxu0 %v1269
      %v1696 = vpop.f32.mrf.mxu0
      %v1697 = vadd.f32 %v1520, %v1696
      %v1698 = vpop.f32.mrf.mxu0
      %v1699 = vpop.f32.mrf.mxu0
      %v1700 = vadd.f32 %v1523, %v1699
      %v1701 = vpop.f32.mrf.mxu0
      %1702 = vmatprep.mubr.bf16.mxu0 0
      %1703 = vmatmul.mubr.bf16.gmra.mxu0 %v1270
      %v1704 = vpop.f32.mrf.mxu0
      %v1705 = vadd.f32 %v1528, %v1704
      %v1706 = vpop.f32.mrf.mxu0
      %v1707 = vpop.f32.mrf.mxu0
      %v1708 = vadd.f32 %v1531, %v1707
      %v1709 = vpop.f32.mrf.mxu0
      %1710 = vmatprep.mubr.bf16.mxu0 0
      %1711 = vmatmul.mubr.bf16.gmra.mxu0 %v1271
      %v1712 = vpop.f32.mrf.mxu0
      %v1713 = vadd.f32 %v1536, %v1712
      %v1714 = vpop.f32.mrf.mxu0
      %v1715 = vpop.f32.mrf.mxu0
      %v1716 = vadd.f32 %v1539, %v1715
      %v1717 = vpop.f32.mrf.mxu0
      %1718 = vmatprep.mubr.bf16.mxu0 0
      %1719 = vmatmul.mubr.bf16.gmra.mxu0 %v1272
      %v1720 = vpop.f32.mrf.mxu0
      %v1721 = vadd.f32 %v1544, %v1720
      %v1722 = vpop.f32.mrf.mxu0
      %v1723 = vpop.f32.mrf.mxu0
      %v1724 = vadd.f32 %v1547, %v1723
      %v1725 = vpop.f32.mrf.mxu0
      %1726 = vmatprep.mubr.bf16.mxu0 0
      %1727 = vmatmul.mubr.bf16.gmra.mxu0 %v1273
      %v1728 = vpop.f32.mrf.mxu0
      %v1729 = vadd.f32 %v1552, %v1728
      %v1730 = vpop.f32.mrf.mxu0
      %v1731 = vpop.f32.mrf.mxu0
      %v1732 = vadd.f32 %v1555, %v1731
      %v1733 = vpop.f32.mrf.mxu0
      %1734 = vmatprep.mubr.bf16.mxu0 0
      %1735 = vmatmul.mubr.bf16.gmra.mxu0 %v1274
      %v1736 = vpop.f32.mrf.mxu0
      %v1737 = vadd.f32 %v1560, %v1736
      %v1738 = vpop.f32.mrf.mxu0
      %v1739 = vpop.f32.mrf.mxu0
      %v1740 = vadd.f32 %v1563, %v1739
      %v1741 = vpop.f32.mrf.mxu0
      %1742 = vmatprep.mubr.bf16.mxu0 0
      %1743 = vmatmul.mubr.bf16.gmra.mxu0 %v1275
      %v1744 = vpop.f32.mrf.mxu0
      %v1745 = vadd.f32 %v1568, %v1744
      %v1746 = vpop.f32.mrf.mxu0
      %v1747 = vpop.f32.mrf.mxu0
      %v1748 = vadd.f32 %v1571, %v1747
      %v1749 = vpop.f32.mrf.mxu0
      %1750 = vmatprep.mubr.bf16.mxu0 0
      %1751 = vmatmul.mubr.bf16.gmra.mxu0 %v1276
      %v1752 = vpop.f32.mrf.mxu0
      %v1753 = vadd.f32 %v1576, %v1752
      %v1754 = vpop.f32.mrf.mxu0
      %v1755 = vpop.f32.mrf.mxu0
      %v1756 = vadd.f32 %v1579, %v1755
      %v1757 = vpop.f32.mrf.mxu0
      %1758 = vdwg.mxu0
      %v1759 = vld [vmem:[%s7] sm:$0x1]
      %v1761 = vlaneseq
      %v1762 = vshrl.u32 %v1761, 7
      %v1763 = vsub.s32 0, %v1762
      %v1764 = vrot.slane %v1759, %v1763
      %v1766 = vadd.f32 %v1665, %v1764
      %v1767 = vadd.f32 %v1668, %v1764
      %v1768 = vadd.f32 %v1673, %v1764
      %v1769 = vadd.f32 %v1676, %v1764
      %v1770 = vadd.f32 %v1681, %v1764
      %v1771 = vadd.f32 %v1684, %v1764
      %v1772 = vadd.f32 %v1689, %v1764
      %v1773 = vadd.f32 %v1692, %v1764
      %v1774 = vadd.f32 %v1697, %v1764
      %v1775 = vadd.f32 %v1700, %v1764
      %v1776 = vadd.f32 %v1705, %v1764
      %v1777 = vadd.f32 %v1708, %v1764
      %v1778 = vadd.f32 %v1713, %v1764
      %v1779 = vadd.f32 %v1716, %v1764
      %v1780 = vadd.f32 %v1721, %v1764
      %v1781 = vadd.f32 %v1724, %v1764
      %v1782 = vadd.f32 %v1729, %v1764
      %v1783 = vadd.f32 %v1732, %v1764
      %v1784 = vadd.f32 %v1737, %v1764
      %v1785 = vadd.f32 %v1740, %v1764
      %v1786 = vadd.f32 %v1745, %v1764
      %v1787 = vadd.f32 %v1748, %v1764
      %v1788 = vadd.f32 %v1753, %v1764
      %v1789 = vadd.f32 %v1756, %v1764
      %1790 = vst [vmem:[%s360] sm:$0xff] %v1766
      %1791 = vst [vmem:[%s360 + $0x8] sm:$0xff] %v1767
      %1792 = vst [vmem:[%s360 + $0x10] sm:$0xff] %v1768
      %1793 = vst [vmem:[%s360 + $0x18] sm:$0xff] %v1769
      %1794 = vst [vmem:[%s360 + $0x20] sm:$0xff] %v1770
      %1795 = vst [vmem:[%s360 + $0x28] sm:$0xff] %v1771
      %1796 = vst [vmem:[%s360 + $0x30] sm:$0xff] %v1772
      %1797 = vst [vmem:[%s360 + $0x38] sm:$0xff] %v1773
      %1798 = vst [vmem:[%s360 + $0x40] sm:$0xff] %v1774
      %1799 = vst [vmem:[%s360 + $0x48] sm:$0xff] %v1775
      %1800 = vst [vmem:[%s360 + $0x50] sm:$0xff] %v1776
      %1801 = vst [vmem:[%s360 + $0x58] sm:$0xff] %v1777
      %1802 = vst [vmem:[%s360 + $0x60] sm:$0xff] %v1778
      %1803 = vst [vmem:[%s360 + $0x68] sm:$0xff] %v1779
      %1804 = vst [vmem:[%s360 + $0x70] sm:$0xff] %v1780
      %1805 = vst [vmem:[%s360 + $0x78] sm:$0xff] %v1781
      %1806 = vst [vmem:[%s360 + $0x80] sm:$0xff] %v1782
      %1807 = vst [vmem:[%s360 + $0x88] sm:$0xff] %v1783
      %1808 = vst [vmem:[%s360 + $0x90] sm:$0xff] %v1784
      %1809 = vst [vmem:[%s360 + $0x98] sm:$0xff] %v1785
      %1810 = vst [vmem:[%s360 + $0xa0] sm:$0xff] %v1786
      %1811 = vst [vmem:[%s360 + $0xa8] sm:$0xff] %v1787
      %1812 = vst [vmem:[%s360 + $0xb0] sm:$0xff] %v1788
      %1813 = vst [vmem:[%s360 + $0xb8] sm:$0xff] %v1789
      %s1814 = smul.u32 24, %s23
      %p1815 = scmp.lt.s32.totalorder %s1814, 47
      %s1816 = scalar_select %p1815, %s1814, 47
      %s1817 = smul.addr %s1816, 8
      %s1818 = scalar_lea.vmem %s8, %s1817
      // Predicated region
      $region53: #{fedgsl_gcn_forward.3} parent=51 // pred_check
        %p1819 = pneg %p229
      $region54: #{fedgsl_gcn_forward.3} parent=51 // pred_check_branch
        %1821 = sbr.rel (%p1819) target = $region56
      $region55: #{fedgsl_gcn_forward.3} parent=51 // pred_region
        %s1822 = smul.u32 24, %s23
      $region56: #{fedgsl_gcn_forward.3} parent=51 // pred_fallthru
        _
    $region52: #{fedgsl_gcn_forward.3} parent=5 // pred_fallthru
      _
    %p1823 = scmp.le.s32.totalorder 2, %s14
    // Predicated region
    $region57: #{fedgsl_gcn_forward.3} parent=5 // pred_check
      %p1824 = pneg %p1823
    $region58: #{fedgsl_gcn_forward.3} parent=5 // pred_check_branch
      %1826 = sbr.rel (%p1824) target = $region60
    $region59: #{fedgsl_gcn_forward.3} parent=5 // pred_region
      %s1827 = ssub.s32 %s14, 2
      // Predicated region
      $region61: #{fedgsl_gcn_forward.3} parent=59 // pred_check
        %p1828 = pneg %p235
      $region62: #{fedgsl_gcn_forward.3} parent=59 // pred_check_branch
        %1830 = sbr.rel (%p1828) target = $region64
      $region63: #{fedgsl_gcn_forward.3} parent=59 // pred_region
        %s1831 = smul.u32 24, %s25
        %p1832 = scmp.lt.s32.totalorder %s1831, 47
        %s1833 = scalar_select %p1832, %s1831, 47
        %s1834 = smul.addr %s1833, 8
        %s1835 = scalar_lea.vmem %s8, %s1834
      $region64: #{fedgsl_gcn_forward.3} parent=59 // pred_fallthru
        _
    $region60: #{fedgsl_gcn_forward.3} parent=5 // pred_fallthru
      _
  $region6: #{fedgsl_gcn_forward.3} parent=0 // loop_footer
    %s18 = sadd.s32 1, %s14
  $region7: #{fedgsl_gcn_forward.3} parent=0 // loop_footer_branch
    %13 = sbr.rel target = $region3
  $region8: #{fedgsl_gcn_forward.3} parent=0 // loop_exit
    _

</llo_original>
